<compile_context>
chip_gen: v5e
topology: v5e:2x2
jax: 0.10.0
libtpu: 0.0.40
codegen_flags: <defaults>
</compile_context>

<pallas_src>
import functools

import jax
import jax.numpy as jnp
from jax.experimental import pallas as pl
from jax.experimental.pallas import tpu as pltpu

BASELINE_DIM = 768
GRAPH_DIM = 128
HIDDEN_DIM = 256
NUM_CLASSES = 2
PAD_CLASSES = 128  # lane-dense classifier width (>= NUM_CLASSES, multiple of 128)

MM_DTYPE = jnp.bfloat16


def _round_up(x, m):
    return (x + m - 1) // m * m


def vulbg_kernel(
    base_ref,    # [TB, 768]  f32    (batch tile, streamed; cast to bf16 in-kernel)
    graph_ref,   # [TB, 128]  f32    (batch tile, streamed; cast to bf16 in-kernel)
    w1_ref,      # [768, 256] bf16   baseline_fc weight (transposed)
    b1_ref,      # [1, 256]   f32
    w2_ref,      # [128, 256] bf16   graph_fc weight (transposed)
    b2_ref,      # [1, 256]   f32
    w3a_ref,     # [256, 256] bf16   combined_fc rows acting on baseline half
    w3b_ref,     # [256, 256] bf16   combined_fc rows acting on graph half
    b3_ref,      # [1, 256]   f32
    w4_ref,      # [256, 128] bf16   classifier weight, cols >= NUM_CLASSES zero
    b4_ref,      # [1, 128]   f32    classifier bias, padded with zeros
    out_ref,     # [TB, 128]  bf16   padded logits
):
    mm = functools.partial(jnp.dot, preferred_element_type=jnp.float32)

    # Cast f32 HBM stream to bf16 on the VPU (DMA-bound kernel -> the cast is free).
    base = base_ref[...].astype(MM_DTYPE)
    graph = graph_ref[...].astype(MM_DTYPE)

    # baseline branch: relu(x @ W1 + b1); dropout(p=0.5) is identity in eval mode.
    # ReLU + bf16 down-cast fused so only the bf16 activation tile stays live.
    bf = jnp.maximum(mm(base, w1_ref[...]) + b1_ref[...], 0.0).astype(MM_DTYPE)

    # graph branch: relu(g @ W2 + b2)
    gf = jnp.maximum(mm(graph, w2_ref[...]) + b2_ref[...], 0.0).astype(MM_DTYPE)

    # combined = relu(concat([bf, gf]) @ W3 + b3)
    # concat-then-matmul is split algebraically: bf @ W3[:H] + gf @ W3[H:]
    comb = jnp.maximum(
        mm(bf, w3a_ref[...]) + mm(gf, w3b_ref[...]) + b3_ref[...], 0.0
    ).astype(MM_DTYPE)

    # classifier logits (lane-dense 128-wide; extra columns are exact zeros)
    logits = mm(comb, w4_ref[...]) + b4_ref[...]
    out_ref[...] = logits.astype(out_ref.dtype)


def _choose_tile(B, block_b):
    """Batch tile: multiple of 8 (sublane), multiple of 128 for big tiles, and
    capped so large batches produce >= 2 grid steps (v7x has 2 TensorCores)."""
    TB = min(block_b, _round_up(B, 8))
    if TB >= 256:
        half = _round_up(pl.cdiv(B, 2), 128)
        TB = max(128, min(_round_up(TB, 128), half))
    return TB


def vulbg_forward(baseline_input, graph_input, params, *, block_b=1024):
    """Fused VulBGModel forward. Returns [B, NUM_CLASSES] f32 logits."""
    B = baseline_input.shape[0]

    TB = _choose_tile(B, block_b)
    Bp = _round_up(B, TB)

    # Inputs stay f32: the kernel casts to bf16 on the VPU, avoiding an extra
    # HBM round-trip for the dominant Bx768 stream.
    base = baseline_input.astype(jnp.float32)
    graph = graph_input.astype(jnp.float32)
    if Bp != B:
        base = jnp.pad(base, ((0, Bp - B), (0, 0)))
        graph = jnp.pad(graph, ((0, Bp - B), (0, 0)))

    # Weights: matmul operands in bf16; biases stay f32 (added to f32 accumulator).
    w1 = params["w1"].astype(MM_DTYPE)
    w2 = params["w2"].astype(MM_DTYPE)
    w3 = params["w3"].astype(MM_DTYPE)
    w3a = w3[:HIDDEN_DIM, :]   # rows acting on the baseline half of the concat
    w3b = w3[HIDDEN_DIM:, :]   # rows acting on the graph half
    w4 = jnp.pad(
        params["w4"], ((0, 0), (0, PAD_CLASSES - NUM_CLASSES))
    ).astype(MM_DTYPE)
    b1 = params["b1"].reshape(1, -1).astype(jnp.float32)
    b2 = params["b2"].reshape(1, -1).astype(jnp.float32)
    b3 = params["b3"].reshape(1, -1).astype(jnp.float32)
    b4 = jnp.pad(params["b4"], (0, PAD_CLASSES - NUM_CLASSES)).reshape(1, -1)
    b4 = b4.astype(jnp.float32)

    grid = (Bp // TB,)

    def batch_spec(cols):
        return pl.BlockSpec((TB, cols), lambda i: (i, 0))

    def pinned(shape):
        # Same block every grid step -> stays VMEM-resident; Buffered(1) skips
        # the pointless double buffer for these constants.
        return pl.BlockSpec(shape, lambda i: (0, 0), pipeline_mode=pl.Buffered(1))

    out_padded = pl.pallas_call(
        vulbg_kernel,
        out_shape=jax.ShapeDtypeStruct((Bp, PAD_CLASSES), jnp.bfloat16),
        grid=grid,
        in_specs=[
            batch_spec(BASELINE_DIM),               # baseline input tile (f32)
            batch_spec(GRAPH_DIM),                  # graph input tile (f32)
            pinned((BASELINE_DIM, HIDDEN_DIM)),     # w1
            pinned((1, HIDDEN_DIM)),                # b1
            pinned((GRAPH_DIM, HIDDEN_DIM)),        # w2
            pinned((1, HIDDEN_DIM)),                # b2
            pinned((HIDDEN_DIM, HIDDEN_DIM)),       # w3a
            pinned((HIDDEN_DIM, HIDDEN_DIM)),       # w3b
            pinned((1, HIDDEN_DIM)),                # b3
            pinned((HIDDEN_DIM, PAD_CLASSES)),      # w4 (padded)
            pinned((1, PAD_CLASSES)),               # b4 (padded)
        ],
        out_specs=batch_spec(PAD_CLASSES),
        compiler_params=pltpu.CompilerParams(
            dimension_semantics=("parallel",),      # batch tiles are independent
            vmem_limit_bytes=48 * 1024 * 1024,      # big tiles fit on v5e too
        ),
    )(base, graph, w1, b1, w2, b2, w3a, w3b, b3, w4, b4)

    return out_padded[:B, :NUM_CLASSES].astype(jnp.float32)


def init_params(key):
    """Deterministic parameter init (Kaiming-uniform-like, nn.Linear shapes).

    Weights stored as [in_features, out_features] (transposed vs. PyTorch's
    [out, in]) so the kernel does x @ W directly.
    """
    ks = jax.random.split(key, 8)

    def linear(kw, kb, fan_in, fan_out):
        bound = 1.0 / jnp.sqrt(fan_in)
        w = jax.random.uniform(kw, (fan_in, fan_out), jnp.float32, -bound, bound)
        b = jax.random.uniform(kb, (fan_out,), jnp.float32, -bound, bound)
        return w, b

    w1, b1 = linear(ks[0], ks[1], BASELINE_DIM, HIDDEN_DIM)
    w2, b2 = linear(ks[2], ks[3], GRAPH_DIM, HIDDEN_DIM)
    w3, b3 = linear(ks[4], ks[5], HIDDEN_DIM * 2, HIDDEN_DIM)
    w4, b4 = linear(ks[6], ks[7], HIDDEN_DIM, NUM_CLASSES)
    return dict(w1=w1, b1=b1, w2=w2, b2=b2, w3=w3, b3=b3, w4=w4, b4=b4)


def reference_forward(baseline_input, graph_input, params):
    """Pure-JAX reference of the PyTorch forward (eval mode), matching the
    kernel's mixed precision: bf16 matmul inputs, f32 accumulation/elementwise."""

    def mm(x, w):
        return jnp.dot(
            x.astype(MM_DTYPE), w.astype(MM_DTYPE),
            preferred_element_type=jnp.float32,
        )

    bf = jax.nn.relu(mm(baseline_input, params["w1"]) + params["b1"])
    gf = jax.nn.relu(mm(graph_input, params["w2"]) + params["b2"])
    comb = jnp.concatenate([bf, gf], axis=1)
    comb = jax.nn.relu(mm(comb, params["w3"]) + params["b3"])
    return mm(comb, params["w4"]) + params["b4"]


if __name__ == "__main__":
    key = jax.random.PRNGKey(0)
    k_base, k_graph, k_params = jax.random.split(key, 3)

    params = init_params(k_params)

    # Small primary test (single grid step, TB=8).
    B = 8
    baseline_input = jax.random.normal(k_base, (B, BASELINE_DIM), jnp.float32)
    graph_input = jax.random.normal(k_graph, (B, GRAPH_DIM), jnp.float32)

    out = jax.block_until_ready(vulbg_forward(baseline_input, graph_input, params))
    ref = reference_forward(baseline_input, graph_input, params)
    assert out.shape == (B, NUM_CLASSES), out.shape
    # bf16 matmuls + bf16 logit writeback -> loose-but-meaningful tolerance.
    assert jnp.allclose(out, ref, atol=2e-2, rtol=2e-2)

    # Larger, non-multiple batch exercises the multi-step grid + padding path
    # (and the v7x >=2-grid-step tile cap).
    B2 = 300
    kb2, kg2 = jax.random.split(jax.random.PRNGKey(1))
    base2 = jax.random.normal(kb2, (B2, BASELINE_DIM), jnp.float32)
    graph2 = jax.random.normal(kg2, (B2, GRAPH_DIM), jnp.float32)
    out2 = jax.block_until_ready(vulbg_forward(base2, graph2, params))
    ref2 = reference_forward(base2, graph2, params)
    assert out2.shape == (B2, NUM_CLASSES), out2.shape
    assert jnp.allclose(out2, ref2, atol=2e-2, rtol=2e-2)

    print("KERNEL_OK")
</pallas_src>

<mosaic_0001>
module attributes {stable_mosaic.version = 11 : i64} {
  func.func @vulbg_kernel(%arg0: i32, %arg1: memref<8x768xf32, #tpu.memory_space<vmem>>, %arg2: memref<8x128xf32, #tpu.memory_space<vmem>>, %arg3: memref<768x256xbf16, #tpu.memory_space<vmem>>, %arg4: memref<1x256xf32, #tpu.memory_space<vmem>>, %arg5: memref<128x256xbf16, #tpu.memory_space<vmem>>, %arg6: memref<1x256xf32, #tpu.memory_space<vmem>>, %arg7: memref<256x256xbf16, #tpu.memory_space<vmem>>, %arg8: memref<256x256xbf16, #tpu.memory_space<vmem>>, %arg9: memref<1x256xf32, #tpu.memory_space<vmem>>, %arg10: memref<256x128xbf16, #tpu.memory_space<vmem>>, %arg11: memref<1x128xf32, #tpu.memory_space<vmem>>, %arg12: memref<8x128xbf16, #tpu.memory_space<vmem>>) attributes {dimension_semantics = [#tpu.dimension_semantics<parallel>], iteration_bounds = array<i64: 1>, scalar_prefetch = 0 : i64, scratch_operands = 0 : i64, tpu.core_type = #tpu.core_type<tc>, window_params = [{transform_indices = @transform_0, window_bounds = array<i64: 8, 768>}, {transform_indices = @transform_1, window_bounds = array<i64: 8, 128>}, {pipeline_mode = #tpu.pipeline_mode<synchronous>, transform_indices = @transform_2, window_bounds = array<i64: 768, 256>}, {pipeline_mode = #tpu.pipeline_mode<synchronous>, transform_indices = @transform_3, window_bounds = array<i64: 1, 256>}, {pipeline_mode = #tpu.pipeline_mode<synchronous>, transform_indices = @transform_4, window_bounds = array<i64: 128, 256>}, {pipeline_mode = #tpu.pipeline_mode<synchronous>, transform_indices = @transform_5, window_bounds = array<i64: 1, 256>}, {pipeline_mode = #tpu.pipeline_mode<synchronous>, transform_indices = @transform_6, window_bounds = array<i64: 256, 256>}, {pipeline_mode = #tpu.pipeline_mode<synchronous>, transform_indices = @transform_7, window_bounds = array<i64: 256, 256>}, {pipeline_mode = #tpu.pipeline_mode<synchronous>, transform_indices = @transform_8, window_bounds = array<i64: 1, 256>}, {pipeline_mode = #tpu.pipeline_mode<synchronous>, transform_indices = @transform_9, window_bounds = array<i64: 256, 128>}, {pipeline_mode = #tpu.pipeline_mode<synchronous>, transform_indices = @transform_10, window_bounds = array<i64: 1, 128>}, {transform_indices = @transform_11, window_bounds = array<i64: 8, 128>}]} {
    %c0 = arith.constant 0 : index
    %c0_0 = arith.constant 0 : index
    %0 = vector.load %arg1[%c0, %c0_0] : memref<8x768xf32, #tpu.memory_space<vmem>>, vector<8x768xf32>
    %1 = arith.truncf %0 : vector<8x768xf32> to vector<8x768xbf16>
    %c0_1 = arith.constant 0 : index
    %c0_2 = arith.constant 0 : index
    %2 = vector.load %arg2[%c0_1, %c0_2] : memref<8x128xf32, #tpu.memory_space<vmem>>, vector<8x128xf32>
    %3 = arith.truncf %2 : vector<8x128xf32> to vector<8x128xbf16>
    %c0_3 = arith.constant 0 : index
    %c0_4 = arith.constant 0 : index
    %4 = vector.load %arg3[%c0_3, %c0_4] : memref<768x256xbf16, #tpu.memory_space<vmem>>, vector<768x256xbf16>
    %cst = arith.constant dense<0.000000e+00> : vector<8x256xf32>
    %5 = tpu.matmul %1, %4, %cst {dimension_numbers = #tpu.dot_dimension_numbers<[1], [0], [0], [1], [0, 0, 1, 1], [], []>} : vector<8x768xbf16>, vector<768x256xbf16>, vector<8x256xf32> -> vector<8x256xf32>
    %c0_5 = arith.constant 0 : index
    %c0_6 = arith.constant 0 : index
    %6 = vector.load %arg4[%c0_5, %c0_6] : memref<1x256xf32, #tpu.memory_space<vmem>>, vector<1x256xf32>
    %7 = vector.broadcast %6 : vector<1x256xf32> to vector<8x256xf32>
    %8 = arith.addf %5, %7 : vector<8x256xf32>
    %cst_7 = arith.constant 0.000000e+00 : f32
    %9 = vector.broadcast %cst_7 : f32 to vector<8x256xf32>
    %10 = arith.maximumf %8, %9 : vector<8x256xf32>
    %11 = arith.truncf %10 : vector<8x256xf32> to vector<8x256xbf16>
    %c0_8 = arith.constant 0 : index
    %c0_9 = arith.constant 0 : index
    %12 = vector.load %arg5[%c0_8, %c0_9] : memref<128x256xbf16, #tpu.memory_space<vmem>>, vector<128x256xbf16>
    %cst_10 = arith.constant dense<0.000000e+00> : vector<8x256xf32>
    %13 = tpu.matmul %3, %12, %cst_10 {dimension_numbers = #tpu.dot_dimension_numbers<[1], [0], [0], [1], [0, 0, 1, 1], [], []>} : vector<8x128xbf16>, vector<128x256xbf16>, vector<8x256xf32> -> vector<8x256xf32>
    %c0_11 = arith.constant 0 : index
    %c0_12 = arith.constant 0 : index
    %14 = vector.load %arg6[%c0_11, %c0_12] : memref<1x256xf32, #tpu.memory_space<vmem>>, vector<1x256xf32>
    %15 = vector.broadcast %14 : vector<1x256xf32> to vector<8x256xf32>
    %16 = arith.addf %13, %15 : vector<8x256xf32>
    %cst_13 = arith.constant 0.000000e+00 : f32
    %17 = vector.broadcast %cst_13 : f32 to vector<8x256xf32>
    %18 = arith.maximumf %16, %17 : vector<8x256xf32>
    %19 = arith.truncf %18 : vector<8x256xf32> to vector<8x256xbf16>
    %c0_14 = arith.constant 0 : index
    %c0_15 = arith.constant 0 : index
    %20 = vector.load %arg7[%c0_14, %c0_15] : memref<256x256xbf16, #tpu.memory_space<vmem>>, vector<256x256xbf16>
    %cst_16 = arith.constant dense<0.000000e+00> : vector<8x256xf32>
    %21 = tpu.matmul %11, %20, %cst_16 {dimension_numbers = #tpu.dot_dimension_numbers<[1], [0], [0], [1], [0, 0, 1, 1], [], []>} : vector<8x256xbf16>, vector<256x256xbf16>, vector<8x256xf32> -> vector<8x256xf32>
    %c0_17 = arith.constant 0 : index
    %c0_18 = arith.constant 0 : index
    %22 = vector.load %arg8[%c0_17, %c0_18] : memref<256x256xbf16, #tpu.memory_space<vmem>>, vector<256x256xbf16>
    %cst_19 = arith.constant dense<0.000000e+00> : vector<8x256xf32>
    %23 = tpu.matmul %19, %22, %cst_19 {dimension_numbers = #tpu.dot_dimension_numbers<[1], [0], [0], [1], [0, 0, 1, 1], [], []>} : vector<8x256xbf16>, vector<256x256xbf16>, vector<8x256xf32> -> vector<8x256xf32>
    %24 = arith.addf %21, %23 : vector<8x256xf32>
    %c0_20 = arith.constant 0 : index
    %c0_21 = arith.constant 0 : index
    %25 = vector.load %arg9[%c0_20, %c0_21] : memref<1x256xf32, #tpu.memory_space<vmem>>, vector<1x256xf32>
    %26 = vector.broadcast %25 : vector<1x256xf32> to vector<8x256xf32>
    %27 = arith.addf %24, %26 : vector<8x256xf32>
    %cst_22 = arith.constant 0.000000e+00 : f32
    %28 = vector.broadcast %cst_22 : f32 to vector<8x256xf32>
    %29 = arith.maximumf %27, %28 : vector<8x256xf32>
    %30 = arith.truncf %29 : vector<8x256xf32> to vector<8x256xbf16>
    %c0_23 = arith.constant 0 : index
    %c0_24 = arith.constant 0 : index
    %31 = vector.load %arg10[%c0_23, %c0_24] : memref<256x128xbf16, #tpu.memory_space<vmem>>, vector<256x128xbf16>
    %cst_25 = arith.constant dense<0.000000e+00> : vector<8x128xf32>
    %32 = tpu.matmul %30, %31, %cst_25 {dimension_numbers = #tpu.dot_dimension_numbers<[1], [0], [0], [1], [0, 0, 1, 1], [], []>} : vector<8x256xbf16>, vector<256x128xbf16>, vector<8x128xf32> -> vector<8x128xf32>
    %c0_26 = arith.constant 0 : index
    %c0_27 = arith.constant 0 : index
    %33 = vector.load %arg11[%c0_26, %c0_27] : memref<1x128xf32, #tpu.memory_space<vmem>>, vector<1x128xf32>
    %34 = vector.broadcast %33 : vector<1x128xf32> to vector<8x128xf32>
    %35 = arith.addf %32, %34 : vector<8x128xf32>
    %36 = arith.truncf %35 : vector<8x128xf32> to vector<8x128xbf16>
    %c0_28 = arith.constant 0 : index
    %c0_29 = arith.constant 0 : index
    %37 = vector.load %arg12[%c0_28, %c0_29] : memref<8x128xbf16, #tpu.memory_space<vmem>>, vector<8x128xbf16>
    tpu.vector_store %arg12[%c0_28, %c0_29], %36 {strides = array<i32>} : memref<8x128xbf16, #tpu.memory_space<vmem>>, vector<8x128xbf16>,
    return
  }
  func.func @transform_0(%arg0: i32) -> (i32, i32) {
    %c0_i32 = arith.constant 0 : i32
    %c0_i32_0 = arith.constant 0 : i32
    return %arg0, %c0_i32 : i32, i32
  }
  func.func @transform_1(%arg0: i32) -> (i32, i32) {
    %c0_i32 = arith.constant 0 : i32
    %c0_i32_0 = arith.constant 0 : i32
    return %arg0, %c0_i32 : i32, i32
  }
  func.func @transform_2(%arg0: i32) -> (i32, i32) {
    %c0_i32 = arith.constant 0 : i32
    %c0_i32_0 = arith.constant 0 : i32
    %c0_i32_1 = arith.constant 0 : i32
    return %c0_i32, %c0_i32_0 : i32, i32
  }
  func.func @transform_3(%arg0: i32) -> (i32, i32) {
    %c0_i32 = arith.constant 0 : i32
    %c0_i32_0 = arith.constant 0 : i32
    %c0_i32_1 = arith.constant 0 : i32
    return %c0_i32, %c0_i32_0 : i32, i32
  }
  func.func @transform_4(%arg0: i32) -> (i32, i32) {
    %c0_i32 = arith.constant 0 : i32
    %c0_i32_0 = arith.constant 0 : i32
    %c0_i32_1 = arith.constant 0 : i32
    return %c0_i32, %c0_i32_0 : i32, i32
  }
  func.func @transform_5(%arg0: i32) -> (i32, i32) {
    %c0_i32 = arith.constant 0 : i32
    %c0_i32_0 = arith.constant 0 : i32
    %c0_i32_1 = arith.constant 0 : i32
    return %c0_i32, %c0_i32_0 : i32, i32
  }
  func.func @transform_6(%arg0: i32) -> (i32, i32) {
    %c0_i32 = arith.constant 0 : i32
    %c0_i32_0 = arith.constant 0 : i32
    %c0_i32_1 = arith.constant 0 : i32
    return %c0_i32, %c0_i32_0 : i32, i32
  }
  func.func @transform_7(%arg0: i32) -> (i32, i32) {
    %c0_i32 = arith.constant 0 : i32
    %c0_i32_0 = arith.constant 0 : i32
    %c0_i32_1 = arith.constant 0 : i32
    return %c0_i32, %c0_i32_0 : i32, i32
  }
  func.func @transform_8(%arg0: i32) -> (i32, i32) {
    %c0_i32 = arith.constant 0 : i32
    %c0_i32_0 = arith.constant 0 : i32
    %c0_i32_1 = arith.constant 0 : i32
    return %c0_i32, %c0_i32_0 : i32, i32
  }
  func.func @transform_9(%arg0: i32) -> (i32, i32) {
    %c0_i32 = arith.constant 0 : i32
    %c0_i32_0 = arith.constant 0 : i32
    %c0_i32_1 = arith.constant 0 : i32
    return %c0_i32, %c0_i32_0 : i32, i32
  }
  func.func @transform_10(%arg0: i32) -> (i32, i32) {
    %c0_i32 = arith.constant 0 : i32
    %c0_i32_0 = arith.constant 0 : i32
    %c0_i32_1 = arith.constant 0 : i32
    return %c0_i32, %c0_i32_0 : i32, i32
  }
  func.func @transform_11(%arg0: i32) -> (i32, i32) {
    %c0_i32 = arith.constant 0 : i32
    %c0_i32_0 = arith.constant 0 : i32
    return %arg0, %c0_i32 : i32, i32
  }
}

</mosaic_0001>

<llo_original>
// kernel: tpu_custom_call.1
$region0: #{tpu_custom_call.1}
  #allocation0 [shape = 'u32[]', space=smem, size = 0x4, offset = 0x4, fixed_abs, tag = 'smem constant byte address 0x4 - core index']
  #allocation1 [shape = 'u32[72,128]{1,0:T(1,128)}', space=vmem, size = 0x9000, scoped, tag = 'internal scratch']
  %s0 = inlined_call_operand.hbm [shape: f32[8,768], index: 0, kind: input, shape index: {}]
  %s1 = inlined_call_operand.hbm [shape: f32[8,128], index: 1, kind: input, shape index: {}]
  %s2 = inlined_call_operand.hbm [shape: bf16[768,256], index: 2, kind: input, shape index: {}]
  %s3 = inlined_call_operand.vmem [shape: f32[1,256], index: 3, kind: input, shape index: {}]
  %s4 = inlined_call_operand.hbm [shape: bf16[128,256], index: 4, kind: input, shape index: {}]
  %s5 = inlined_call_operand.vmem [shape: f32[1,256], index: 5, kind: input, shape index: {}]
  %s6 = inlined_call_operand.hbm [shape: bf16[256,256], index: 6, kind: input, shape index: {}]
  %s7 = inlined_call_operand.hbm [shape: bf16[256,256], index: 7, kind: input, shape index: {}]
  %s8 = inlined_call_operand.vmem [shape: f32[1,256], index: 8, kind: input, shape index: {}]
  %s9 = inlined_call_operand.hbm [shape: bf16[256,128], index: 9, kind: input, shape index: {}]
  %s10 = inlined_call_operand.vmem [shape: f32[1,128], index: 10, kind: input, shape index: {}]
  %s11 = inlined_call_operand.hbm [shape: bf16[8,128], index: 11, kind: output, shape index: {}]
  %s12 = sld [smem:[#allocation0]]
  $region82: #{tpu_custom_call.1} parent=0
    _
  %s14 = ssub.s32 1, %s12
  %s15 = scalar_select 0, %s14, %s12
  $region1: #{tpu_custom_call.1} parent=0
    #allocation2 [shape = 'u8[24576]{0}', space=vmem, size = 0x6000, scoped, tag = 'input window, operand 0, single buffered']
    #allocation3 [shape = 's32[1]{0}', space=sflag, size = 0x4, scoped, tag = 'scoped memory for tpu_custom_call.1']
    #allocation4 [shape = 's32[1]{0}', space=sflag, size = 0x4, scoped, tag = 'scoped memory for tpu_custom_call.1']
    #allocation5 [shape = 'u8[4096]{0}', space=vmem, size = 0x1000, scoped, tag = 'input window, operand 1, single buffered']
    #allocation6 [shape = 's32[1]{0}', space=sflag, size = 0x4, scoped, tag = 'scoped memory for tpu_custom_call.1']
    #allocation7 [shape = 'u8[393216]{0}', space=vmem, size = 0x60000, scoped, tag = 'input window, operand 2, single buffered']
    #allocation8 [shape = 'u8[65536]{0}', space=vmem, size = 0x10000, scoped, tag = 'input window, operand 4, single buffered']
    #allocation9 [shape = 's32[1]{0}', space=sflag, size = 0x4, scoped, tag = 'scoped memory for tpu_custom_call.1']
    #allocation10 [shape = 'u8[131072]{0}', space=vmem, size = 0x20000, scoped, tag = 'input window, operand 6, single buffered']
    #allocation11 [shape = 'u8[131072]{0}', space=vmem, size = 0x20000, scoped, tag = 'input window, operand 7, single buffered']
    #allocation12 [shape = 's32[1]{0}', space=sflag, size = 0x4, scoped, tag = 'scoped memory for tpu_custom_call.1']
    #allocation13 [shape = 'u8[65536]{0}', space=vmem, size = 0x10000, scoped, tag = 'input window, operand 9, single buffered']
    #allocation14 [shape = 'u8[2048]{0}', space=vmem, size = 0x800, scoped, tag = 'output window, operand 0, single buffered']
    %16 = vsyncpa [#allocation3], 0
    %17 = vsyncpa [#allocation6], 0
    %18 = vsyncpa [#allocation9], 0
    %19 = vsyncpa [#allocation12], 0
    %20 = vsyncpa [#allocation4], 0
    // Predicated region
    $region2: #{tpu_custom_call.1} parent=1 // pred_check
      _
    $region3: #{tpu_custom_call.1} parent=1 // pred_check_branch
      %22 = sbr.rel (0) target = $region5
    $region4: #{tpu_custom_call.1} parent=1 // pred_region
      %24 = vsyncadd [#allocation3], 0
      %s26 = sshll.u32 %s0, 4
      %s27 = int_to_ptr.hbm [resolvable:$true] %s26
      %s28 = sshll.u32 [#allocation2], 4
      %s29 = int_to_ptr.vmem [resolvable:$true] %s28
      %31 = dma.hbm_to_vmem [thread:$0]  %s27, 768, %s29, [#allocation3]
    $region5: #{tpu_custom_call.1} parent=1 // pred_fallthru
      _
    // Predicated region
    $region6: #{tpu_custom_call.1} parent=1 // pred_check
      _
    $region7: #{tpu_custom_call.1} parent=1 // pred_check_branch
      %33 = sbr.rel (0) target = $region9
    $region8: #{tpu_custom_call.1} parent=1 // pred_region
      %35 = vsyncadd [#allocation6], 0
      %s37 = sshll.u32 %s1, 4
      %s38 = int_to_ptr.hbm [resolvable:$true] %s37
      %s39 = sshll.u32 [#allocation5], 4
      %s40 = int_to_ptr.vmem [resolvable:$true] %s39
      %42 = dma.hbm_to_vmem [thread:$0]  %s38, 128, %s40, [#allocation6]
    $region9: #{tpu_custom_call.1} parent=1 // pred_fallthru
      _
    // Predicated region
    $region10: #{tpu_custom_call.1} parent=1 // pred_check
      _
    $region11: #{tpu_custom_call.1} parent=1 // pred_check_branch
      %44 = sbr.rel (0) target = $region13
    $region12: #{tpu_custom_call.1} parent=1 // pred_region
      %46 = vsyncadd [#allocation6], 0
      %s47 = sshll.u32 %s2, 4
      %s48 = int_to_ptr.hbm [resolvable:$true] %s47
      %s49 = sshll.u32 [#allocation7], 4
      %s50 = int_to_ptr.vmem [resolvable:$true] %s49
      %55 = dma.hbm_to_vmem [thread:$0]  %s48, 12288, %s50, [#allocation6], 128, 128, 8
    $region13: #{tpu_custom_call.1} parent=1 // pred_fallthru
      _
    // Predicated region
    $region14: #{tpu_custom_call.1} parent=1 // pred_check
      _
    $region15: #{tpu_custom_call.1} parent=1 // pred_check_branch
      %57 = sbr.rel (0) target = $region17
    $region16: #{tpu_custom_call.1} parent=1 // pred_region
      _
    $region17: #{tpu_custom_call.1} parent=1 // pred_fallthru
      _
    // Predicated region
    $region18: #{tpu_custom_call.1} parent=1 // pred_check
      _
    $region19: #{tpu_custom_call.1} parent=1 // pred_check_branch
      %59 = sbr.rel (0) target = $region21
    $region20: #{tpu_custom_call.1} parent=1 // pred_region
      %61 = vsyncadd [#allocation9], 0
      %s62 = sshll.u32 %s4, 4
      %s63 = int_to_ptr.hbm [resolvable:$true] %s62
      %s64 = sshll.u32 [#allocation8], 4
      %s65 = int_to_ptr.vmem [resolvable:$true] %s64
      %70 = dma.hbm_to_vmem [thread:$0]  %s63, 2048, %s65, [#allocation9], 128, 128, 8
    $region21: #{tpu_custom_call.1} parent=1 // pred_fallthru
      _
    // Predicated region
    $region22: #{tpu_custom_call.1} parent=1 // pred_check
      _
    $region23: #{tpu_custom_call.1} parent=1 // pred_check_branch
      %72 = sbr.rel (0) target = $region25
    $region24: #{tpu_custom_call.1} parent=1 // pred_region
      _
    $region25: #{tpu_custom_call.1} parent=1 // pred_fallthru
      _
    // Predicated region
    $region26: #{tpu_custom_call.1} parent=1 // pred_check
      _
    $region27: #{tpu_custom_call.1} parent=1 // pred_check_branch
      %74 = sbr.rel (0) target = $region29
    $region28: #{tpu_custom_call.1} parent=1 // pred_region
      %76 = vsyncadd [#allocation9], 0
      %s77 = sshll.u32 %s6, 4
      %s78 = int_to_ptr.hbm [resolvable:$true] %s77
      %s79 = sshll.u32 [#allocation10], 4
      %s80 = int_to_ptr.vmem [resolvable:$true] %s79
      %85 = dma.hbm_to_vmem [thread:$0]  %s78, 4096, %s80, [#allocation9], 128, 128, 8
    $region29: #{tpu_custom_call.1} parent=1 // pred_fallthru
      _
    // Predicated region
    $region30: #{tpu_custom_call.1} parent=1 // pred_check
      _
    $region31: #{tpu_custom_call.1} parent=1 // pred_check_branch
      %87 = sbr.rel (0) target = $region33
    $region32: #{tpu_custom_call.1} parent=1 // pred_region
      %89 = vsyncadd [#allocation12], 0
      %s90 = sshll.u32 %s7, 4
      %s91 = int_to_ptr.hbm [resolvable:$true] %s90
      %s92 = sshll.u32 [#allocation11], 4
      %s93 = int_to_ptr.vmem [resolvable:$true] %s92
      %98 = dma.hbm_to_vmem [thread:$0]  %s91, 4096, %s93, [#allocation12], 128, 128, 8
    $region33: #{tpu_custom_call.1} parent=1 // pred_fallthru
      _
    // Predicated region
    $region34: #{tpu_custom_call.1} parent=1 // pred_check
      _
    $region35: #{tpu_custom_call.1} parent=1 // pred_check_branch
      %100 = sbr.rel (0) target = $region37
    $region36: #{tpu_custom_call.1} parent=1 // pred_region
      _
    $region37: #{tpu_custom_call.1} parent=1 // pred_fallthru
      _
    // Predicated region
    $region38: #{tpu_custom_call.1} parent=1 // pred_check
      _
    $region39: #{tpu_custom_call.1} parent=1 // pred_check_branch
      %102 = sbr.rel (0) target = $region41
    $region40: #{tpu_custom_call.1} parent=1 // pred_region
      %104 = vsyncadd [#allocation12], 0
      %s105 = sshll.u32 %s9, 4
      %s106 = int_to_ptr.hbm [resolvable:$true] %s105
      %s107 = sshll.u32 [#allocation13], 4
      %s108 = int_to_ptr.vmem [resolvable:$true] %s107
      %113 = dma.hbm_to_vmem [thread:$0]  %s106, 2048, %s108, [#allocation12], 64, 64, 4
    $region41: #{tpu_custom_call.1} parent=1 // pred_fallthru
      _
    // Predicated region
    $region42: #{tpu_custom_call.1} parent=1 // pred_check
      _
    $region43: #{tpu_custom_call.1} parent=1 // pred_check_branch
      %115 = sbr.rel (0) target = $region45
    $region44: #{tpu_custom_call.1} parent=1 // pred_region
      _
    $region45: #{tpu_custom_call.1} parent=1 // pred_fallthru
      _
    // Predicated region
    $region46: #{tpu_custom_call.1} parent=1 // pred_check
      _
    $region47: #{tpu_custom_call.1} parent=1 // pred_check_branch
      %117 = sbr.rel (0) target = $region49
    $region48: #{tpu_custom_call.1} parent=1 // pred_region
      %119 = dma.done [#allocation3], 768
    $region49: #{tpu_custom_call.1} parent=1 // pred_fallthru
      _
    // Predicated region
    $region50: #{tpu_custom_call.1} parent=1 // pred_check
      _
    $region51: #{tpu_custom_call.1} parent=1 // pred_check_branch
      %121 = sbr.rel (0) target = $region53
    $region52: #{tpu_custom_call.1} parent=1 // pred_region
      %123 = dma.done [#allocation6], 128
    $region53: #{tpu_custom_call.1} parent=1 // pred_fallthru
      _
    // Predicated region
    $region54: #{tpu_custom_call.1} parent=1 // pred_check
      _
    $region55: #{tpu_custom_call.1} parent=1 // pred_check_branch
      %125 = sbr.rel (0) target = $region57
    $region56: #{tpu_custom_call.1} parent=1 // pred_region
      %127 = dma.done [#allocation6], 12288
    $region57: #{tpu_custom_call.1} parent=1 // pred_fallthru
      _
    // Predicated region
    $region58: #{tpu_custom_call.1} parent=1 // pred_check
      _
    $region59: #{tpu_custom_call.1} parent=1 // pred_check_branch
      %129 = sbr.rel (0) target = $region61
    $region60: #{tpu_custom_call.1} parent=1 // pred_region
      %131 = dma.done [#allocation9], 2048
    $region61: #{tpu_custom_call.1} parent=1 // pred_fallthru
      _
    // Predicated region
    $region62: #{tpu_custom_call.1} parent=1 // pred_check
      _
    $region63: #{tpu_custom_call.1} parent=1 // pred_check_branch
      %133 = sbr.rel (0) target = $region65
    $region64: #{tpu_custom_call.1} parent=1 // pred_region
      %135 = dma.done [#allocation9], 4096
    $region65: #{tpu_custom_call.1} parent=1 // pred_fallthru
      _
    // Predicated region
    $region66: #{tpu_custom_call.1} parent=1 // pred_check
      _
    $region67: #{tpu_custom_call.1} parent=1 // pred_check_branch
      %137 = sbr.rel (0) target = $region69
    $region68: #{tpu_custom_call.1} parent=1 // pred_region
      %139 = dma.done [#allocation12], 4096
    $region69: #{tpu_custom_call.1} parent=1 // pred_fallthru
      _
    // Predicated region
    $region70: #{tpu_custom_call.1} parent=1 // pred_check
      _
    $region71: #{tpu_custom_call.1} parent=1 // pred_check_branch
      %141 = sbr.rel (0) target = $region73
    $region72: #{tpu_custom_call.1} parent=1 // pred_region
      %143 = dma.done [#allocation12], 2048
    $region73: #{tpu_custom_call.1} parent=1 // pred_fallthru
      _
    %v144 = vld [vmem:[#allocation2] sm:$0xff]
    %v145 = vld [vmem:[#allocation2 + $0x8] sm:$0xff]
    %v146 = vld [vmem:[#allocation2 + $0x10] sm:$0xff]
    %v147 = vld [vmem:[#allocation2 + $0x18] sm:$0xff]
    %v148 = vld [vmem:[#allocation2 + $0x20] sm:$0xff]
    %v149 = vld [vmem:[#allocation2 + $0x28] sm:$0xff]
    %v150 = vpack.c.bf16 %v144, %v144
    %v151 = vpack.c.bf16 %v145, %v145
    %v152 = vpack.c.bf16 %v146, %v146
    %v153 = vpack.c.bf16 %v147, %v147
    %v154 = vpack.c.bf16 %v148, %v148
    %v155 = vpack.c.bf16 %v149, %v149
    %v156 = vld [vmem:[#allocation5] sm:$0xff]
    %v157 = vpack.c.bf16 %v156, %v156
    %v158 = vld [vmem:[#allocation7] sm:$0xff]
    %v159 = vld [vmem:[#allocation7 + $0x8] sm:$0xff]
    %v160 = vld [vmem:[#allocation7 + $0x10] sm:$0xff]
    %v161 = vld [vmem:[#allocation7 + $0x18] sm:$0xff]
    %v162 = vld [vmem:[#allocation7 + $0x20] sm:$0xff]
    %v163 = vld [vmem:[#allocation7 + $0x28] sm:$0xff]
    %v164 = vld [vmem:[#allocation7 + $0x30] sm:$0xff]
    %v165 = vld [vmem:[#allocation7 + $0x38] sm:$0xff]
    %v166 = vld [vmem:[#allocation7 + $0x40] sm:$0xff]
    %v167 = vld [vmem:[#allocation7 + $0x48] sm:$0xff]
    %v168 = vld [vmem:[#allocation7 + $0x50] sm:$0xff]
    %v169 = vld [vmem:[#allocation7 + $0x58] sm:$0xff]
    %v170 = vld [vmem:[#allocation7 + $0x60] sm:$0xff]
    %v171 = vld [vmem:[#allocation7 + $0x68] sm:$0xff]
    %v172 = vld [vmem:[#allocation7 + $0x70] sm:$0xff]
    %v173 = vld [vmem:[#allocation7 + $0x78] sm:$0xff]
    %v174 = vld [vmem:[#allocation7 + $0x80] sm:$0xff]
    %v175 = vld [vmem:[#allocation7 + $0x88] sm:$0xff]
    %v176 = vld [vmem:[#allocation7 + $0x90] sm:$0xff]
    %v177 = vld [vmem:[#allocation7 + $0x98] sm:$0xff]
    %v178 = vld [vmem:[#allocation7 + $0xa0] sm:$0xff]
    %v179 = vld [vmem:[#allocation7 + $0xa8] sm:$0xff]
    %v180 = vld [vmem:[#allocation7 + $0xb0] sm:$0xff]
    %v181 = vld [vmem:[#allocation7 + $0xb8] sm:$0xff]
    %v182 = vld [vmem:[#allocation7 + $0xc0] sm:$0xff]
    %v183 = vld [vmem:[#allocation7 + $0xc8] sm:$0xff]
    %v184 = vld [vmem:[#allocation7 + $0xd0] sm:$0xff]
    %v185 = vld [vmem:[#allocation7 + $0xd8] sm:$0xff]
    %v186 = vld [vmem:[#allocation7 + $0xe0] sm:$0xff]
    %v187 = vld [vmem:[#allocation7 + $0xe8] sm:$0xff]
    %v188 = vld [vmem:[#allocation7 + $0xf0] sm:$0xff]
    %v189 = vld [vmem:[#allocation7 + $0xf8] sm:$0xff]
    %v190 = vld [vmem:[#allocation7 + $0x100] sm:$0xff]
    %v191 = vld [vmem:[#allocation7 + $0x108] sm:$0xff]
    %v192 = vld [vmem:[#allocation7 + $0x110] sm:$0xff]
    %v193 = vld [vmem:[#allocation7 + $0x118] sm:$0xff]
    %v194 = vld [vmem:[#allocation7 + $0x120] sm:$0xff]
    %v195 = vld [vmem:[#allocation7 + $0x128] sm:$0xff]
    %v196 = vld [vmem:[#allocation7 + $0x130] sm:$0xff]
    %v197 = vld [vmem:[#allocation7 + $0x138] sm:$0xff]
    %v198 = vld [vmem:[#allocation7 + $0x140] sm:$0xff]
    %v199 = vld [vmem:[#allocation7 + $0x148] sm:$0xff]
    %v200 = vld [vmem:[#allocation7 + $0x150] sm:$0xff]
    %v201 = vld [vmem:[#allocation7 + $0x158] sm:$0xff]
    %v202 = vld [vmem:[#allocation7 + $0x160] sm:$0xff]
    %v203 = vld [vmem:[#allocation7 + $0x168] sm:$0xff]
    %v204 = vld [vmem:[#allocation7 + $0x170] sm:$0xff]
    %v205 = vld [vmem:[#allocation7 + $0x178] sm:$0xff]
    %v206 = vld [vmem:[#allocation7 + $0x180] sm:$0xff]
    %v207 = vld [vmem:[#allocation7 + $0x188] sm:$0xff]
    %v208 = vld [vmem:[#allocation7 + $0x190] sm:$0xff]
    %v209 = vld [vmem:[#allocation7 + $0x198] sm:$0xff]
    %v210 = vld [vmem:[#allocation7 + $0x1a0] sm:$0xff]
    %v211 = vld [vmem:[#allocation7 + $0x1a8] sm:$0xff]
    %v212 = vld [vmem:[#allocation7 + $0x1b0] sm:$0xff]
    %v213 = vld [vmem:[#allocation7 + $0x1b8] sm:$0xff]
    %v214 = vld [vmem:[#allocation7 + $0x1c0] sm:$0xff]
    %v215 = vld [vmem:[#allocation7 + $0x1c8] sm:$0xff]
    %v216 = vld [vmem:[#allocation7 + $0x1d0] sm:$0xff]
    %v217 = vld [vmem:[#allocation7 + $0x1d8] sm:$0xff]
    %v218 = vld [vmem:[#allocation7 + $0x1e0] sm:$0xff]
    %v219 = vld [vmem:[#allocation7 + $0x1e8] sm:$0xff]
    %v220 = vld [vmem:[#allocation7 + $0x1f0] sm:$0xff]
    %v221 = vld [vmem:[#allocation7 + $0x1f8] sm:$0xff]
    %v222 = vld [vmem:[#allocation7 + $0x200] sm:$0xff]
    %v223 = vld [vmem:[#allocation7 + $0x208] sm:$0xff]
    %v224 = vld [vmem:[#allocation7 + $0x210] sm:$0xff]
    %v225 = vld [vmem:[#allocation7 + $0x218] sm:$0xff]
    %v226 = vld [vmem:[#allocation7 + $0x220] sm:$0xff]
    %v227 = vld [vmem:[#allocation7 + $0x228] sm:$0xff]
    %v228 = vld [vmem:[#allocation7 + $0x230] sm:$0xff]
    %v229 = vld [vmem:[#allocation7 + $0x238] sm:$0xff]
    %v230 = vld [vmem:[#allocation7 + $0x240] sm:$0xff]
    %v231 = vld [vmem:[#allocation7 + $0x248] sm:$0xff]
    %v232 = vld [vmem:[#allocation7 + $0x250] sm:$0xff]
    %v233 = vld [vmem:[#allocation7 + $0x258] sm:$0xff]
    %v234 = vld [vmem:[#allocation7 + $0x260] sm:$0xff]
    %v235 = vld [vmem:[#allocation7 + $0x268] sm:$0xff]
    %v236 = vld [vmem:[#allocation7 + $0x270] sm:$0xff]
    %v237 = vld [vmem:[#allocation7 + $0x278] sm:$0xff]
    %v238 = vld [vmem:[#allocation7 + $0x280] sm:$0xff]
    %v239 = vld [vmem:[#allocation7 + $0x288] sm:$0xff]
    %v240 = vld [vmem:[#allocation7 + $0x290] sm:$0xff]
    %v241 = vld [vmem:[#allocation7 + $0x298] sm:$0xff]
    %v242 = vld [vmem:[#allocation7 + $0x2a0] sm:$0xff]
    %v243 = vld [vmem:[#allocation7 + $0x2a8] sm:$0xff]
    %v244 = vld [vmem:[#allocation7 + $0x2b0] sm:$0xff]
    %v245 = vld [vmem:[#allocation7 + $0x2b8] sm:$0xff]
    %v246 = vld [vmem:[#allocation7 + $0x2c0] sm:$0xff]
    %v247 = vld [vmem:[#allocation7 + $0x2c8] sm:$0xff]
    %v248 = vld [vmem:[#allocation7 + $0x2d0] sm:$0xff]
    %v249 = vld [vmem:[#allocation7 + $0x2d8] sm:$0xff]
    %v250 = vld [vmem:[#allocation7 + $0x2e0] sm:$0xff]
    %v251 = vld [vmem:[#allocation7 + $0x2e8] sm:$0xff]
    %v252 = vld [vmem:[#allocation7 + $0x2f0] sm:$0xff]
    %v253 = vld [vmem:[#allocation7 + $0x2f8] sm:$0xff]
    %v254 = vld [vmem:[%s3] sm:$0x3]
    %v256 = vperm.slane %v254, 0
    %v257 = vperm.slane %v254, 1
    %v356 = vunpack.c.l.b16 %v158
    %v357 = vunpack.c.h.b16 %v158
    %v358 = vunpack.c.l.b16 %v159
    %v359 = vunpack.c.h.b16 %v159
    %v360 = vunpack.c.l.b16 %v160
    %v361 = vunpack.c.h.b16 %v160
    %v362 = vunpack.c.l.b16 %v161
    %v363 = vunpack.c.h.b16 %v161
    %v364 = vunpack.c.l.b16 %v162
    %v365 = vunpack.c.h.b16 %v162
    %v366 = vunpack.c.l.b16 %v163
    %v367 = vunpack.c.h.b16 %v163
    %v368 = vunpack.c.l.b16 %v164
    %v369 = vunpack.c.h.b16 %v164
    %v370 = vunpack.c.l.b16 %v165
    %v371 = vunpack.c.h.b16 %v165
    %v372 = vunpack.c.l.b16 %v166
    %v373 = vunpack.c.h.b16 %v166
    %v374 = vunpack.c.l.b16 %v167
    %v375 = vunpack.c.h.b16 %v167
    %v376 = vunpack.c.l.b16 %v168
    %v377 = vunpack.c.h.b16 %v168
    %v378 = vunpack.c.l.b16 %v169
    %v379 = vunpack.c.h.b16 %v169
    %v380 = vunpack.c.l.b16 %v170
    %v381 = vunpack.c.h.b16 %v170
    %v382 = vunpack.c.l.b16 %v171
    %v383 = vunpack.c.h.b16 %v171
    %v384 = vunpack.c.l.b16 %v172
    %v385 = vunpack.c.h.b16 %v172
    %v386 = vunpack.c.l.b16 %v173
    %v387 = vunpack.c.h.b16 %v173
    %v388 = vunpack.c.l.b16 %v174
    %v389 = vunpack.c.h.b16 %v174
    %v390 = vunpack.c.l.b16 %v175
    %v391 = vunpack.c.h.b16 %v175
    %v392 = vunpack.c.l.b16 %v176
    %v393 = vunpack.c.h.b16 %v176
    %v394 = vunpack.c.l.b16 %v177
    %v395 = vunpack.c.h.b16 %v177
    %v396 = vunpack.c.l.b16 %v178
    %v397 = vunpack.c.h.b16 %v178
    %v398 = vunpack.c.l.b16 %v179
    %v399 = vunpack.c.h.b16 %v179
    %v400 = vunpack.c.l.b16 %v180
    %v401 = vunpack.c.h.b16 %v180
    %v402 = vunpack.c.l.b16 %v181
    %v403 = vunpack.c.h.b16 %v181
    %v404 = vunpack.c.l.b16 %v182
    %v405 = vunpack.c.h.b16 %v182
    %v406 = vunpack.c.l.b16 %v183
    %v407 = vunpack.c.h.b16 %v183
    %v408 = vunpack.c.l.b16 %v184
    %v409 = vunpack.c.h.b16 %v184
    %v410 = vunpack.c.l.b16 %v185
    %v411 = vunpack.c.h.b16 %v185
    %v412 = vunpack.c.l.b16 %v186
    %v413 = vunpack.c.h.b16 %v186
    %v414 = vunpack.c.l.b16 %v187
    %v415 = vunpack.c.h.b16 %v187
    %v416 = vunpack.c.l.b16 %v188
    %v417 = vunpack.c.h.b16 %v188
    %v418 = vunpack.c.l.b16 %v189
    %v419 = vunpack.c.h.b16 %v189
    %v420 = vunpack.c.l.b16 %v190
    %v421 = vunpack.c.h.b16 %v190
    %v422 = vunpack.c.l.b16 %v191
    %v423 = vunpack.c.h.b16 %v191
    %v424 = vunpack.c.l.b16 %v192
    %v425 = vunpack.c.h.b16 %v192
    %v426 = vunpack.c.l.b16 %v193
    %v427 = vunpack.c.h.b16 %v193
    %v428 = vunpack.c.l.b16 %v194
    %v429 = vunpack.c.h.b16 %v194
    %v430 = vunpack.c.l.b16 %v195
    %v431 = vunpack.c.h.b16 %v195
    %v432 = vunpack.c.l.b16 %v196
    %v433 = vunpack.c.h.b16 %v196
    %v434 = vunpack.c.l.b16 %v197
    %v435 = vunpack.c.h.b16 %v197
    %v436 = vunpack.c.l.b16 %v198
    %v437 = vunpack.c.h.b16 %v198
    %v438 = vunpack.c.l.b16 %v199
    %v439 = vunpack.c.h.b16 %v199
    %v440 = vunpack.c.l.b16 %v200
    %v441 = vunpack.c.h.b16 %v200
    %v442 = vunpack.c.l.b16 %v201
    %v443 = vunpack.c.h.b16 %v201
    %v444 = vunpack.c.l.b16 %v202
    %v445 = vunpack.c.h.b16 %v202
    %v446 = vunpack.c.l.b16 %v203
    %v447 = vunpack.c.h.b16 %v203
    %v448 = vunpack.c.l.b16 %v204
    %v449 = vunpack.c.h.b16 %v204
    %v450 = vunpack.c.l.b16 %v205
    %v451 = vunpack.c.h.b16 %v205
    %v452 = vunpack.c.l.b16 %v206
    %v453 = vunpack.c.h.b16 %v206
    %v454 = vunpack.c.l.b16 %v207
    %v455 = vunpack.c.h.b16 %v207
    %v456 = vunpack.c.l.b16 %v208
    %v457 = vunpack.c.h.b16 %v208
    %v458 = vunpack.c.l.b16 %v209
    %v459 = vunpack.c.h.b16 %v209
    %v460 = vunpack.c.l.b16 %v210
    %v461 = vunpack.c.h.b16 %v210
    %v462 = vunpack.c.l.b16 %v211
    %v463 = vunpack.c.h.b16 %v211
    %v464 = vunpack.c.l.b16 %v212
    %v465 = vunpack.c.h.b16 %v212
    %v466 = vunpack.c.l.b16 %v213
    %v467 = vunpack.c.h.b16 %v213
    %v468 = vunpack.c.l.b16 %v214
    %v469 = vunpack.c.h.b16 %v214
    %v470 = vunpack.c.l.b16 %v215
    %v471 = vunpack.c.h.b16 %v215
    %v472 = vunpack.c.l.b16 %v216
    %v473 = vunpack.c.h.b16 %v216
    %v474 = vunpack.c.l.b16 %v217
    %v475 = vunpack.c.h.b16 %v217
    %v476 = vunpack.c.l.b16 %v218
    %v477 = vunpack.c.h.b16 %v218
    %v478 = vunpack.c.l.b16 %v219
    %v479 = vunpack.c.h.b16 %v219
    %v480 = vunpack.c.l.b16 %v220
    %v481 = vunpack.c.h.b16 %v220
    %v482 = vunpack.c.l.b16 %v221
    %v483 = vunpack.c.h.b16 %v221
    %v484 = vunpack.c.l.b16 %v222
    %v485 = vunpack.c.h.b16 %v222
    %v486 = vunpack.c.l.b16 %v223
    %v487 = vunpack.c.h.b16 %v223
    %v488 = vunpack.c.l.b16 %v224
    %v489 = vunpack.c.h.b16 %v224
    %v490 = vunpack.c.l.b16 %v225
    %v491 = vunpack.c.h.b16 %v225
    %v492 = vunpack.c.l.b16 %v226
    %v493 = vunpack.c.h.b16 %v226
    %v494 = vunpack.c.l.b16 %v227
    %v495 = vunpack.c.h.b16 %v227
    %v496 = vunpack.c.l.b16 %v228
    %v497 = vunpack.c.h.b16 %v228
    %v498 = vunpack.c.l.b16 %v229
    %v499 = vunpack.c.h.b16 %v229
    %v500 = vunpack.c.l.b16 %v230
    %v501 = vunpack.c.h.b16 %v230
    %v502 = vunpack.c.l.b16 %v231
    %v503 = vunpack.c.h.b16 %v231
    %v504 = vunpack.c.l.b16 %v232
    %v505 = vunpack.c.h.b16 %v232
    %v506 = vunpack.c.l.b16 %v233
    %v507 = vunpack.c.h.b16 %v233
    %v508 = vunpack.c.l.b16 %v234
    %v509 = vunpack.c.h.b16 %v234
    %v510 = vunpack.c.l.b16 %v235
    %v511 = vunpack.c.h.b16 %v235
    %v512 = vunpack.c.l.b16 %v236
    %v513 = vunpack.c.h.b16 %v236
    %v514 = vunpack.c.l.b16 %v237
    %v515 = vunpack.c.h.b16 %v237
    %v516 = vunpack.c.l.b16 %v238
    %v517 = vunpack.c.h.b16 %v238
    %v518 = vunpack.c.l.b16 %v239
    %v519 = vunpack.c.h.b16 %v239
    %v520 = vunpack.c.l.b16 %v240
    %v521 = vunpack.c.h.b16 %v240
    %v522 = vunpack.c.l.b16 %v241
    %v523 = vunpack.c.h.b16 %v241
    %v524 = vunpack.c.l.b16 %v242
    %v525 = vunpack.c.h.b16 %v242
    %v526 = vunpack.c.l.b16 %v243
    %v527 = vunpack.c.h.b16 %v243
    %v528 = vunpack.c.l.b16 %v244
    %v529 = vunpack.c.h.b16 %v244
    %v530 = vunpack.c.l.b16 %v245
    %v531 = vunpack.c.h.b16 %v245
    %v532 = vunpack.c.l.b16 %v246
    %v533 = vunpack.c.h.b16 %v246
    %v534 = vunpack.c.l.b16 %v247
    %v535 = vunpack.c.h.b16 %v247
    %v536 = vunpack.c.l.b16 %v248
    %v537 = vunpack.c.h.b16 %v248
    %v538 = vunpack.c.l.b16 %v249
    %v539 = vunpack.c.h.b16 %v249
    %v540 = vunpack.c.l.b16 %v250
    %v541 = vunpack.c.h.b16 %v250
    %v542 = vunpack.c.l.b16 %v251
    %v543 = vunpack.c.h.b16 %v251
    %v544 = vunpack.c.l.b16 %v252
    %v545 = vunpack.c.h.b16 %v252
    %v546 = vunpack.c.l.b16 %v253
    %v547 = vunpack.c.h.b16 %v253
    %v548 = vpack.c.b16 %v358, %v356
    %v549 = vpack.c.b16 %v359, %v357
    %v550 = vpack.c.b16 %v362, %v360
    %v551 = vpack.c.b16 %v363, %v361
    %v552 = vpack.c.b16 %v366, %v364
    %v553 = vpack.c.b16 %v367, %v365
    %v554 = vpack.c.b16 %v370, %v368
    %v555 = vpack.c.b16 %v371, %v369
    %v556 = vpack.c.b16 %v374, %v372
    %v557 = vpack.c.b16 %v375, %v373
    %v558 = vpack.c.b16 %v378, %v376
    %v559 = vpack.c.b16 %v379, %v377
    %v560 = vpack.c.b16 %v382, %v380
    %v561 = vpack.c.b16 %v383, %v381
    %v562 = vpack.c.b16 %v386, %v384
    %v563 = vpack.c.b16 %v387, %v385
    %v564 = vpack.c.b16 %v390, %v388
    %v565 = vpack.c.b16 %v391, %v389
    %v566 = vpack.c.b16 %v394, %v392
    %v567 = vpack.c.b16 %v395, %v393
    %v568 = vpack.c.b16 %v398, %v396
    %v569 = vpack.c.b16 %v399, %v397
    %v570 = vpack.c.b16 %v402, %v400
    %v571 = vpack.c.b16 %v403, %v401
    %v572 = vpack.c.b16 %v406, %v404
    %v573 = vpack.c.b16 %v407, %v405
    %v574 = vpack.c.b16 %v410, %v408
    %v575 = vpack.c.b16 %v411, %v409
    %v576 = vpack.c.b16 %v414, %v412
    %v577 = vpack.c.b16 %v415, %v413
    %v578 = vpack.c.b16 %v418, %v416
    %v579 = vpack.c.b16 %v419, %v417
    %v580 = vpack.c.b16 %v422, %v420
    %v581 = vpack.c.b16 %v423, %v421
    %v582 = vpack.c.b16 %v426, %v424
    %v583 = vpack.c.b16 %v427, %v425
    %v584 = vpack.c.b16 %v430, %v428
    %v585 = vpack.c.b16 %v431, %v429
    %v586 = vpack.c.b16 %v434, %v432
    %v587 = vpack.c.b16 %v435, %v433
    %v588 = vpack.c.b16 %v438, %v436
    %v589 = vpack.c.b16 %v439, %v437
    %v590 = vpack.c.b16 %v442, %v440
    %v591 = vpack.c.b16 %v443, %v441
    %v592 = vpack.c.b16 %v446, %v444
    %v593 = vpack.c.b16 %v447, %v445
    %v594 = vpack.c.b16 %v450, %v448
    %v595 = vpack.c.b16 %v451, %v449
    %v596 = vpack.c.b16 %v454, %v452
    %v597 = vpack.c.b16 %v455, %v453
    %v598 = vpack.c.b16 %v458, %v456
    %v599 = vpack.c.b16 %v459, %v457
    %v600 = vpack.c.b16 %v462, %v460
    %v601 = vpack.c.b16 %v463, %v461
    %v602 = vpack.c.b16 %v466, %v464
    %v603 = vpack.c.b16 %v467, %v465
    %v604 = vpack.c.b16 %v470, %v468
    %v605 = vpack.c.b16 %v471, %v469
    %v606 = vpack.c.b16 %v474, %v472
    %v607 = vpack.c.b16 %v475, %v473
    %v608 = vpack.c.b16 %v478, %v476
    %v609 = vpack.c.b16 %v479, %v477
    %v610 = vpack.c.b16 %v482, %v480
    %v611 = vpack.c.b16 %v483, %v481
    %v612 = vpack.c.b16 %v486, %v484
    %v613 = vpack.c.b16 %v487, %v485
    %v614 = vpack.c.b16 %v490, %v488
    %v615 = vpack.c.b16 %v491, %v489
    %v616 = vpack.c.b16 %v494, %v492
    %v617 = vpack.c.b16 %v495, %v493
    %v618 = vpack.c.b16 %v498, %v496
    %v619 = vpack.c.b16 %v499, %v497
    %v620 = vpack.c.b16 %v502, %v500
    %v621 = vpack.c.b16 %v503, %v501
    %v622 = vpack.c.b16 %v506, %v504
    %v623 = vpack.c.b16 %v507, %v505
    %v624 = vpack.c.b16 %v510, %v508
    %v625 = vpack.c.b16 %v511, %v509
    %v626 = vpack.c.b16 %v514, %v512
    %v627 = vpack.c.b16 %v515, %v513
    %v628 = vpack.c.b16 %v518, %v516
    %v629 = vpack.c.b16 %v519, %v517
    %v630 = vpack.c.b16 %v522, %v520
    %v631 = vpack.c.b16 %v523, %v521
    %v632 = vpack.c.b16 %v526, %v524
    %v633 = vpack.c.b16 %v527, %v525
    %v634 = vpack.c.b16 %v530, %v528
    %v635 = vpack.c.b16 %v531, %v529
    %v636 = vpack.c.b16 %v534, %v532
    %v637 = vpack.c.b16 %v535, %v533
    %v638 = vpack.c.b16 %v538, %v536
    %v639 = vpack.c.b16 %v539, %v537
    %v640 = vpack.c.b16 %v542, %v540
    %v641 = vpack.c.b16 %v543, %v541
    %v642 = vpack.c.b16 %v546, %v544
    %v643 = vpack.c.b16 %v547, %v545
    %740 = vmatpush.bf16.msra.mxu0 %v562
    %741 = vmatpush.bf16.msra.mxu0 %v560
    %742 = vmatpush.bf16.msra.mxu0 %v558
    %743 = vmatpush.bf16.msra.mxu0 %v556
    %744 = vmatpush.bf16.msra.mxu0 %v554
    %745 = vmatpush.bf16.msra.mxu0 %v552
    %746 = vmatpush.bf16.msra.mxu0 %v550
    %747 = vmatpush.bf16.msra.mxu0 %v548
    %748 = vmatmul.bf16.gmra.mxu0 %v150
    %v749 = vpop.f32.mrf.mxu0
    %v750 = vadd.f32 %v256, %v749
    %v751 = vpop.f32.mrf.mxu0
    %752 = vdwg.mxu0
    %753 = vmatpush.bf16.msra.mxu0 %v578
    %754 = vmatpush.bf16.msra.mxu0 %v576
    %755 = vmatpush.bf16.msra.mxu0 %v574
    %756 = vmatpush.bf16.msra.mxu0 %v572
    %757 = vmatpush.bf16.msra.mxu0 %v570
    %758 = vmatpush.bf16.msra.mxu0 %v568
    %759 = vmatpush.bf16.msra.mxu0 %v566
    %760 = vmatpush.bf16.msra.mxu0 %v564
    %761 = vmatmul.bf16.gmra.mxu0 %v151
    %v762 = vpop.f32.mrf.mxu0
    %v763 = vadd.f32 %v750, %v762
    %v764 = vpop.f32.mrf.mxu0
    %765 = vdwg.mxu0
    %766 = vmatpush.bf16.msra.mxu0 %v594
    %767 = vmatpush.bf16.msra.mxu0 %v592
    %768 = vmatpush.bf16.msra.mxu0 %v590
    %769 = vmatpush.bf16.msra.mxu0 %v588
    %770 = vmatpush.bf16.msra.mxu0 %v586
    %771 = vmatpush.bf16.msra.mxu0 %v584
    %772 = vmatpush.bf16.msra.mxu0 %v582
    %773 = vmatpush.bf16.msra.mxu0 %v580
    %774 = vmatmul.bf16.gmra.mxu0 %v152
    %v775 = vpop.f32.mrf.mxu0
    %v776 = vadd.f32 %v763, %v775
    %v777 = vpop.f32.mrf.mxu0
    %778 = vdwg.mxu0
    %779 = vmatpush.bf16.msra.mxu0 %v610
    %780 = vmatpush.bf16.msra.mxu0 %v608
    %781 = vmatpush.bf16.msra.mxu0 %v606
    %782 = vmatpush.bf16.msra.mxu0 %v604
    %783 = vmatpush.bf16.msra.mxu0 %v602
    %784 = vmatpush.bf16.msra.mxu0 %v600
    %785 = vmatpush.bf16.msra.mxu0 %v598
    %786 = vmatpush.bf16.msra.mxu0 %v596
    %787 = vmatmul.bf16.gmra.mxu0 %v153
    %v788 = vpop.f32.mrf.mxu0
    %v789 = vadd.f32 %v776, %v788
    %v790 = vpop.f32.mrf.mxu0
    %791 = vdwg.mxu0
    %792 = vmatpush.bf16.msra.mxu0 %v626
    %793 = vmatpush.bf16.msra.mxu0 %v624
    %794 = vmatpush.bf16.msra.mxu0 %v622
    %795 = vmatpush.bf16.msra.mxu0 %v620
    %796 = vmatpush.bf16.msra.mxu0 %v618
    %797 = vmatpush.bf16.msra.mxu0 %v616
    %798 = vmatpush.bf16.msra.mxu0 %v614
    %799 = vmatpush.bf16.msra.mxu0 %v612
    %800 = vmatmul.bf16.gmra.mxu0 %v154
    %v801 = vpop.f32.mrf.mxu0
    %v802 = vadd.f32 %v789, %v801
    %v803 = vpop.f32.mrf.mxu0
    %804 = vdwg.mxu0
    %805 = vmatpush.bf16.msra.mxu0 %v642
    %806 = vmatpush.bf16.msra.mxu0 %v640
    %807 = vmatpush.bf16.msra.mxu0 %v638
    %808 = vmatpush.bf16.msra.mxu0 %v636
    %809 = vmatpush.bf16.msra.mxu0 %v634
    %810 = vmatpush.bf16.msra.mxu0 %v632
    %811 = vmatpush.bf16.msra.mxu0 %v630
    %812 = vmatpush.bf16.msra.mxu0 %v628
    %813 = vmatmul.bf16.gmra.mxu0 %v155
    %v814 = vpop.f32.mrf.mxu0
    %v815 = vadd.f32 %v802, %v814
    %v816 = vpop.f32.mrf.mxu0
    %817 = vdwg.mxu0
    %818 = vmatpush.bf16.msra.mxu0 %v563
    %819 = vmatpush.bf16.msra.mxu0 %v561
    %820 = vmatpush.bf16.msra.mxu0 %v559
    %821 = vmatpush.bf16.msra.mxu0 %v557
    %822 = vmatpush.bf16.msra.mxu0 %v555
    %823 = vmatpush.bf16.msra.mxu0 %v553
    %824 = vmatpush.bf16.msra.mxu0 %v551
    %825 = vmatpush.bf16.msra.mxu0 %v549
    %826 = vmatmul.bf16.gmra.mxu0 %v150
    %v827 = vpop.f32.mrf.mxu0
    %v828 = vadd.f32 %v257, %v827
    %v829 = vpop.f32.mrf.mxu0
    %830 = vdwg.mxu0
    %831 = vmatpush.bf16.msra.mxu0 %v579
    %832 = vmatpush.bf16.msra.mxu0 %v577
    %833 = vmatpush.bf16.msra.mxu0 %v575
    %834 = vmatpush.bf16.msra.mxu0 %v573
    %835 = vmatpush.bf16.msra.mxu0 %v571
    %836 = vmatpush.bf16.msra.mxu0 %v569
    %837 = vmatpush.bf16.msra.mxu0 %v567
    %838 = vmatpush.bf16.msra.mxu0 %v565
    %839 = vmatmul.bf16.gmra.mxu0 %v151
    %v840 = vpop.f32.mrf.mxu0
    %v841 = vadd.f32 %v828, %v840
    %v842 = vpop.f32.mrf.mxu0
    %843 = vdwg.mxu0
    %844 = vmatpush.bf16.msra.mxu0 %v595
    %845 = vmatpush.bf16.msra.mxu0 %v593
    %846 = vmatpush.bf16.msra.mxu0 %v591
    %847 = vmatpush.bf16.msra.mxu0 %v589
    %848 = vmatpush.bf16.msra.mxu0 %v587
    %849 = vmatpush.bf16.msra.mxu0 %v585
    %850 = vmatpush.bf16.msra.mxu0 %v583
    %851 = vmatpush.bf16.msra.mxu0 %v581
    %852 = vmatmul.bf16.gmra.mxu0 %v152
    %v853 = vpop.f32.mrf.mxu0
    %v854 = vadd.f32 %v841, %v853
    %v855 = vpop.f32.mrf.mxu0
    %856 = vdwg.mxu0
    %857 = vmatpush.bf16.msra.mxu0 %v611
    %858 = vmatpush.bf16.msra.mxu0 %v609
    %859 = vmatpush.bf16.msra.mxu0 %v607
    %860 = vmatpush.bf16.msra.mxu0 %v605
    %861 = vmatpush.bf16.msra.mxu0 %v603
    %862 = vmatpush.bf16.msra.mxu0 %v601
    %863 = vmatpush.bf16.msra.mxu0 %v599
    %864 = vmatpush.bf16.msra.mxu0 %v597
    %865 = vmatmul.bf16.gmra.mxu0 %v153
    %v866 = vpop.f32.mrf.mxu0
    %v867 = vadd.f32 %v854, %v866
    %v868 = vpop.f32.mrf.mxu0
    %869 = vdwg.mxu0
    %870 = vmatpush.bf16.msra.mxu0 %v627
    %871 = vmatpush.bf16.msra.mxu0 %v625
    %872 = vmatpush.bf16.msra.mxu0 %v623
    %873 = vmatpush.bf16.msra.mxu0 %v621
    %874 = vmatpush.bf16.msra.mxu0 %v619
    %875 = vmatpush.bf16.msra.mxu0 %v617
    %876 = vmatpush.bf16.msra.mxu0 %v615
    %877 = vmatpush.bf16.msra.mxu0 %v613
    %878 = vmatmul.bf16.gmra.mxu0 %v154
    %v879 = vpop.f32.mrf.mxu0
    %v880 = vadd.f32 %v867, %v879
    %v881 = vpop.f32.mrf.mxu0
    %882 = vdwg.mxu0
    %883 = vmatpush.bf16.msra.mxu0 %v643
    %884 = vmatpush.bf16.msra.mxu0 %v641
    %885 = vmatpush.bf16.msra.mxu0 %v639
    %886 = vmatpush.bf16.msra.mxu0 %v637
    %887 = vmatpush.bf16.msra.mxu0 %v635
    %888 = vmatpush.bf16.msra.mxu0 %v633
    %889 = vmatpush.bf16.msra.mxu0 %v631
    %890 = vmatpush.bf16.msra.mxu0 %v629
    %891 = vmatmul.bf16.gmra.mxu0 %v155
    %v892 = vpop.f32.mrf.mxu0
    %v893 = vadd.f32 %v880, %v892
    %v894 = vpop.f32.mrf.mxu0
    %895 = vdwg.mxu0
    %v896 = vmax.f32 %v815, 0.0
    %v897 = vmax.f32 %v893, 0.0
    %v898 = vpack.c.bf16 %v896, %v896
    %v899 = vpack.c.bf16 %v897, %v897
    %v900 = vld [vmem:[#allocation8] sm:$0xff]
    %v901 = vld [vmem:[#allocation8 + $0x8] sm:$0xff]
    %v902 = vld [vmem:[#allocation8 + $0x10] sm:$0xff]
    %v903 = vld [vmem:[#allocation8 + $0x18] sm:$0xff]
    %v904 = vld [vmem:[#allocation8 + $0x20] sm:$0xff]
    %v905 = vld [vmem:[#allocation8 + $0x28] sm:$0xff]
    %v906 = vld [vmem:[#allocation8 + $0x30] sm:$0xff]
    %v907 = vld [vmem:[#allocation8 + $0x38] sm:$0xff]
    %v908 = vld [vmem:[#allocation8 + $0x40] sm:$0xff]
    %v909 = vld [vmem:[#allocation8 + $0x48] sm:$0xff]
    %v910 = vld [vmem:[#allocation8 + $0x50] sm:$0xff]
    %v911 = vld [vmem:[#allocation8 + $0x58] sm:$0xff]
    %v912 = vld [vmem:[#allocation8 + $0x60] sm:$0xff]
    %v913 = vld [vmem:[#allocation8 + $0x68] sm:$0xff]
    %v914 = vld [vmem:[#allocation8 + $0x70] sm:$0xff]
    %v915 = vld [vmem:[#allocation8 + $0x78] sm:$0xff]
    %v916 = vld [vmem:[%s5] sm:$0x3]
    %v918 = vperm.slane %v916, 0
    %v919 = vperm.slane %v916, 1
    %v938 = vunpack.c.l.b16 %v900
    %v939 = vunpack.c.h.b16 %v900
    %v940 = vunpack.c.l.b16 %v901
    %v941 = vunpack.c.h.b16 %v901
    %v942 = vunpack.c.l.b16 %v902
    %v943 = vunpack.c.h.b16 %v902
    %v944 = vunpack.c.l.b16 %v903
    %v945 = vunpack.c.h.b16 %v903
    %v946 = vunpack.c.l.b16 %v904
    %v947 = vunpack.c.h.b16 %v904
    %v948 = vunpack.c.l.b16 %v905
    %v949 = vunpack.c.h.b16 %v905
    %v950 = vunpack.c.l.b16 %v906
    %v951 = vunpack.c.h.b16 %v906
    %v952 = vunpack.c.l.b16 %v907
    %v953 = vunpack.c.h.b16 %v907
    %v954 = vunpack.c.l.b16 %v908
    %v955 = vunpack.c.h.b16 %v908
    %v956 = vunpack.c.l.b16 %v909
    %v957 = vunpack.c.h.b16 %v909
    %v958 = vunpack.c.l.b16 %v910
    %v959 = vunpack.c.h.b16 %v910
    %v960 = vunpack.c.l.b16 %v911
    %v961 = vunpack.c.h.b16 %v911
    %v962 = vunpack.c.l.b16 %v912
    %v963 = vunpack.c.h.b16 %v912
    %v964 = vunpack.c.l.b16 %v913
    %v965 = vunpack.c.h.b16 %v913
    %v966 = vunpack.c.l.b16 %v914
    %v967 = vunpack.c.h.b16 %v914
    %v968 = vunpack.c.l.b16 %v915
    %v969 = vunpack.c.h.b16 %v915
    %v970 = vpack.c.b16 %v940, %v938
    %v971 = vpack.c.b16 %v941, %v939
    %v972 = vpack.c.b16 %v944, %v942
    %v973 = vpack.c.b16 %v945, %v943
    %v974 = vpack.c.b16 %v948, %v946
    %v975 = vpack.c.b16 %v949, %v947
    %v976 = vpack.c.b16 %v952, %v950
    %v977 = vpack.c.b16 %v953, %v951
    %v978 = vpack.c.b16 %v956, %v954
    %v979 = vpack.c.b16 %v957, %v955
    %v980 = vpack.c.b16 %v960, %v958
    %v981 = vpack.c.b16 %v961, %v959
    %v982 = vpack.c.b16 %v964, %v962
    %v983 = vpack.c.b16 %v965, %v963
    %v984 = vpack.c.b16 %v968, %v966
    %v985 = vpack.c.b16 %v969, %v967
    %1002 = vmatpush.bf16.msra.mxu0 %v984
    %1003 = vmatpush.bf16.msra.mxu0 %v982
    %1004 = vmatpush.bf16.msra.mxu0 %v980
    %1005 = vmatpush.bf16.msra.mxu0 %v978
    %1006 = vmatpush.bf16.msra.mxu0 %v976
    %1007 = vmatpush.bf16.msra.mxu0 %v974
    %1008 = vmatpush.bf16.msra.mxu0 %v972
    %1009 = vmatpush.bf16.msra.mxu0 %v970
    %1010 = vmatmul.bf16.gmra.mxu0 %v157
    %v1011 = vpop.f32.mrf.mxu0
    %v1012 = vadd.f32 %v918, %v1011
    %v1013 = vpop.f32.mrf.mxu0
    %1014 = vdwg.mxu0
    %1015 = vmatpush.bf16.msra.mxu0 %v985
    %1016 = vmatpush.bf16.msra.mxu0 %v983
    %1017 = vmatpush.bf16.msra.mxu0 %v981
    %1018 = vmatpush.bf16.msra.mxu0 %v979
    %1019 = vmatpush.bf16.msra.mxu0 %v977
    %1020 = vmatpush.bf16.msra.mxu0 %v975
    %1021 = vmatpush.bf16.msra.mxu0 %v973
    %1022 = vmatpush.bf16.msra.mxu0 %v971
    %1023 = vmatmul.bf16.gmra.mxu0 %v157
    %v1024 = vpop.f32.mrf.mxu0
    %v1025 = vadd.f32 %v919, %v1024
    %v1026 = vpop.f32.mrf.mxu0
    %1027 = vdwg.mxu0
    %v1028 = vmax.f32 %v1012, 0.0
    %v1029 = vmax.f32 %v1025, 0.0
    %v1030 = vpack.c.bf16 %v1028, %v1028
    %v1031 = vpack.c.bf16 %v1029, %v1029
    %v1032 = vld [vmem:[#allocation10] sm:$0xff]
    %v1033 = vld [vmem:[#allocation10 + $0x8] sm:$0xff]
    %v1034 = vld [vmem:[#allocation10 + $0x10] sm:$0xff]
    %v1035 = vld [vmem:[#allocation10 + $0x18] sm:$0xff]
    %v1036 = vld [vmem:[#allocation10 + $0x20] sm:$0xff]
    %v1037 = vld [vmem:[#allocation10 + $0x28] sm:$0xff]
    %v1038 = vld [vmem:[#allocation10 + $0x30] sm:$0xff]
    %v1039 = vld [vmem:[#allocation10 + $0x38] sm:$0xff]
    %v1040 = vld [vmem:[#allocation10 + $0x40] sm:$0xff]
    %v1041 = vld [vmem:[#allocation10 + $0x48] sm:$0xff]
    %v1042 = vld [vmem:[#allocation10 + $0x50] sm:$0xff]
    %v1043 = vld [vmem:[#allocation10 + $0x58] sm:$0xff]
    %v1044 = vld [vmem:[#allocation10 + $0x60] sm:$0xff]
    %v1045 = vld [vmem:[#allocation10 + $0x68] sm:$0xff]
    %v1046 = vld [vmem:[#allocation10 + $0x70] sm:$0xff]
    %v1047 = vld [vmem:[#allocation10 + $0x78] sm:$0xff]
    %v1048 = vld [vmem:[#allocation10 + $0x80] sm:$0xff]
    %v1049 = vld [vmem:[#allocation10 + $0x88] sm:$0xff]
    %v1050 = vld [vmem:[#allocation10 + $0x90] sm:$0xff]
    %v1051 = vld [vmem:[#allocation10 + $0x98] sm:$0xff]
    %v1052 = vld [vmem:[#allocation10 + $0xa0] sm:$0xff]
    %v1053 = vld [vmem:[#allocation10 + $0xa8] sm:$0xff]
    %v1054 = vld [vmem:[#allocation10 + $0xb0] sm:$0xff]
    %v1055 = vld [vmem:[#allocation10 + $0xb8] sm:$0xff]
    %v1056 = vld [vmem:[#allocation10 + $0xc0] sm:$0xff]
    %v1057 = vld [vmem:[#allocation10 + $0xc8] sm:$0xff]
    %v1058 = vld [vmem:[#allocation10 + $0xd0] sm:$0xff]
    %v1059 = vld [vmem:[#allocation10 + $0xd8] sm:$0xff]
    %v1060 = vld [vmem:[#allocation10 + $0xe0] sm:$0xff]
    %v1061 = vld [vmem:[#allocation10 + $0xe8] sm:$0xff]
    %v1062 = vld [vmem:[#allocation10 + $0xf0] sm:$0xff]
    %v1063 = vld [vmem:[#allocation10 + $0xf8] sm:$0xff]
    %v1064 = vld [vmem:[#allocation11] sm:$0xff]
    %v1065 = vld [vmem:[#allocation11 + $0x8] sm:$0xff]
    %v1066 = vld [vmem:[#allocation11 + $0x10] sm:$0xff]
    %v1067 = vld [vmem:[#allocation11 + $0x18] sm:$0xff]
    %v1068 = vld [vmem:[#allocation11 + $0x20] sm:$0xff]
    %v1069 = vld [vmem:[#allocation11 + $0x28] sm:$0xff]
    %v1070 = vld [vmem:[#allocation11 + $0x30] sm:$0xff]
    %v1071 = vld [vmem:[#allocation11 + $0x38] sm:$0xff]
    %v1072 = vld [vmem:[#allocation11 + $0x40] sm:$0xff]
    %v1073 = vld [vmem:[#allocation11 + $0x48] sm:$0xff]
    %v1074 = vld [vmem:[#allocation11 + $0x50] sm:$0xff]
    %v1075 = vld [vmem:[#allocation11 + $0x58] sm:$0xff]
    %v1076 = vld [vmem:[#allocation11 + $0x60] sm:$0xff]
    %v1077 = vld [vmem:[#allocation11 + $0x68] sm:$0xff]
    %v1078 = vld [vmem:[#allocation11 + $0x70] sm:$0xff]
    %v1079 = vld [vmem:[#allocation11 + $0x78] sm:$0xff]
    %v1080 = vld [vmem:[#allocation11 + $0x80] sm:$0xff]
    %v1081 = vld [vmem:[#allocation11 + $0x88] sm:$0xff]
    %v1082 = vld [vmem:[#allocation11 + $0x90] sm:$0xff]
    %v1083 = vld [vmem:[#allocation11 + $0x98] sm:$0xff]
    %v1084 = vld [vmem:[#allocation11 + $0xa0] sm:$0xff]
    %v1085 = vld [vmem:[#allocation11 + $0xa8] sm:$0xff]
    %v1086 = vld [vmem:[#allocation11 + $0xb0] sm:$0xff]
    %v1087 = vld [vmem:[#allocation11 + $0xb8] sm:$0xff]
    %v1088 = vld [vmem:[#allocation11 + $0xc0] sm:$0xff]
    %v1089 = vld [vmem:[#allocation11 + $0xc8] sm:$0xff]
    %v1090 = vld [vmem:[#allocation11 + $0xd0] sm:$0xff]
    %v1091 = vld [vmem:[#allocation11 + $0xd8] sm:$0xff]
    %v1092 = vld [vmem:[#allocation11 + $0xe0] sm:$0xff]
    %v1093 = vld [vmem:[#allocation11 + $0xe8] sm:$0xff]
    %v1094 = vld [vmem:[#allocation11 + $0xf0] sm:$0xff]
    %v1095 = vld [vmem:[#allocation11 + $0xf8] sm:$0xff]
    %v1128 = vunpack.c.l.b16 %v1064
    %v1129 = vunpack.c.h.b16 %v1064
    %v1130 = vunpack.c.l.b16 %v1065
    %v1131 = vunpack.c.h.b16 %v1065
    %v1132 = vunpack.c.l.b16 %v1066
    %v1133 = vunpack.c.h.b16 %v1066
    %v1134 = vunpack.c.l.b16 %v1067
    %v1135 = vunpack.c.h.b16 %v1067
    %v1136 = vunpack.c.l.b16 %v1068
    %v1137 = vunpack.c.h.b16 %v1068
    %v1138 = vunpack.c.l.b16 %v1069
    %v1139 = vunpack.c.h.b16 %v1069
    %v1140 = vunpack.c.l.b16 %v1070
    %v1141 = vunpack.c.h.b16 %v1070
    %v1142 = vunpack.c.l.b16 %v1071
    %v1143 = vunpack.c.h.b16 %v1071
    %v1144 = vunpack.c.l.b16 %v1072
    %v1145 = vunpack.c.h.b16 %v1072
    %v1146 = vunpack.c.l.b16 %v1073
    %v1147 = vunpack.c.h.b16 %v1073
    %v1148 = vunpack.c.l.b16 %v1074
    %v1149 = vunpack.c.h.b16 %v1074
    %v1150 = vunpack.c.l.b16 %v1075
    %v1151 = vunpack.c.h.b16 %v1075
    %v1152 = vunpack.c.l.b16 %v1076
    %v1153 = vunpack.c.h.b16 %v1076
    %v1154 = vunpack.c.l.b16 %v1077
    %v1155 = vunpack.c.h.b16 %v1077
    %v1156 = vunpack.c.l.b16 %v1078
    %v1157 = vunpack.c.h.b16 %v1078
    %v1158 = vunpack.c.l.b16 %v1079
    %v1159 = vunpack.c.h.b16 %v1079
    %v1160 = vunpack.c.l.b16 %v1080
    %v1161 = vunpack.c.h.b16 %v1080
    %v1162 = vunpack.c.l.b16 %v1081
    %v1163 = vunpack.c.h.b16 %v1081
    %v1164 = vunpack.c.l.b16 %v1082
    %v1165 = vunpack.c.h.b16 %v1082
    %v1166 = vunpack.c.l.b16 %v1083
    %v1167 = vunpack.c.h.b16 %v1083
    %v1168 = vunpack.c.l.b16 %v1084
    %v1169 = vunpack.c.h.b16 %v1084
    %v1170 = vunpack.c.l.b16 %v1085
    %v1171 = vunpack.c.h.b16 %v1085
    %v1172 = vunpack.c.l.b16 %v1086
    %v1173 = vunpack.c.h.b16 %v1086
    %v1174 = vunpack.c.l.b16 %v1087
    %v1175 = vunpack.c.h.b16 %v1087
    %v1176 = vunpack.c.l.b16 %v1088
    %v1177 = vunpack.c.h.b16 %v1088
    %v1178 = vunpack.c.l.b16 %v1089
    %v1179 = vunpack.c.h.b16 %v1089
    %v1180 = vunpack.c.l.b16 %v1090
    %v1181 = vunpack.c.h.b16 %v1090
    %v1182 = vunpack.c.l.b16 %v1091
    %v1183 = vunpack.c.h.b16 %v1091
    %v1184 = vunpack.c.l.b16 %v1092
    %v1185 = vunpack.c.h.b16 %v1092
    %v1186 = vunpack.c.l.b16 %v1093
    %v1187 = vunpack.c.h.b16 %v1093
    %v1188 = vunpack.c.l.b16 %v1094
    %v1189 = vunpack.c.h.b16 %v1094
    %v1190 = vunpack.c.l.b16 %v1095
    %v1191 = vunpack.c.h.b16 %v1095
    %v1192 = vpack.c.b16 %v1130, %v1128
    %v1193 = vpack.c.b16 %v1131, %v1129
    %v1194 = vpack.c.b16 %v1134, %v1132
    %v1195 = vpack.c.b16 %v1135, %v1133
    %v1196 = vpack.c.b16 %v1138, %v1136
    %v1197 = vpack.c.b16 %v1139, %v1137
    %v1198 = vpack.c.b16 %v1142, %v1140
    %v1199 = vpack.c.b16 %v1143, %v1141
    %v1200 = vpack.c.b16 %v1146, %v1144
    %v1201 = vpack.c.b16 %v1147, %v1145
    %v1202 = vpack.c.b16 %v1150, %v1148
    %v1203 = vpack.c.b16 %v1151, %v1149
    %v1204 = vpack.c.b16 %v1154, %v1152
    %v1205 = vpack.c.b16 %v1155, %v1153
    %v1206 = vpack.c.b16 %v1158, %v1156
    %v1207 = vpack.c.b16 %v1159, %v1157
    %v1208 = vpack.c.b16 %v1162, %v1160
    %v1209 = vpack.c.b16 %v1163, %v1161
    %v1210 = vpack.c.b16 %v1166, %v1164
    %v1211 = vpack.c.b16 %v1167, %v1165
    %v1212 = vpack.c.b16 %v1170, %v1168
    %v1213 = vpack.c.b16 %v1171, %v1169
    %v1214 = vpack.c.b16 %v1174, %v1172
    %v1215 = vpack.c.b16 %v1175, %v1173
    %v1216 = vpack.c.b16 %v1178, %v1176
    %v1217 = vpack.c.b16 %v1179, %v1177
    %v1218 = vpack.c.b16 %v1182, %v1180
    %v1219 = vpack.c.b16 %v1183, %v1181
    %v1220 = vpack.c.b16 %v1186, %v1184
    %v1221 = vpack.c.b16 %v1187, %v1185
    %v1222 = vpack.c.b16 %v1190, %v1188
    %v1223 = vpack.c.b16 %v1191, %v1189
    %1256 = vmatpush.bf16.msra.mxu0 %v1206
    %1257 = vmatpush.bf16.msra.mxu0 %v1204
    %1258 = vmatpush.bf16.msra.mxu0 %v1202
    %1259 = vmatpush.bf16.msra.mxu0 %v1200
    %1260 = vmatpush.bf16.msra.mxu0 %v1198
    %1261 = vmatpush.bf16.msra.mxu0 %v1196
    %1262 = vmatpush.bf16.msra.mxu0 %v1194
    %1263 = vmatpush.bf16.msra.mxu0 %v1192
    %1264 = vmatmul.bf16.gmra.mxu0 %v1030
    %v1265 = vpop.f32.mrf.mxu0
    %v1266 = vadd.f32 0.0, %v1265
    %v1267 = vpop.f32.mrf.mxu0
    %1268 = vdwg.mxu0
    %1269 = vmatpush.bf16.msra.mxu0 %v1222
    %1270 = vmatpush.bf16.msra.mxu0 %v1220
    %1271 = vmatpush.bf16.msra.mxu0 %v1218
    %1272 = vmatpush.bf16.msra.mxu0 %v1216
    %1273 = vmatpush.bf16.msra.mxu0 %v1214
    %1274 = vmatpush.bf16.msra.mxu0 %v1212
    %1275 = vmatpush.bf16.msra.mxu0 %v1210
    %1276 = vmatpush.bf16.msra.mxu0 %v1208
    %1277 = vmatmul.bf16.gmra.mxu0 %v1031
    %v1278 = vpop.f32.mrf.mxu0
    %v1279 = vadd.f32 %v1266, %v1278
    %v1280 = vpop.f32.mrf.mxu0
    %1281 = vdwg.mxu0
    %1282 = vmatpush.bf16.msra.mxu0 %v1207
    %1283 = vmatpush.bf16.msra.mxu0 %v1205
    %1284 = vmatpush.bf16.msra.mxu0 %v1203
    %1285 = vmatpush.bf16.msra.mxu0 %v1201
    %1286 = vmatpush.bf16.msra.mxu0 %v1199
    %1287 = vmatpush.bf16.msra.mxu0 %v1197
    %1288 = vmatpush.bf16.msra.mxu0 %v1195
    %1289 = vmatpush.bf16.msra.mxu0 %v1193
    %1290 = vmatmul.bf16.gmra.mxu0 %v1030
    %v1291 = vpop.f32.mrf.mxu0
    %v1292 = vadd.f32 0.0, %v1291
    %v1293 = vpop.f32.mrf.mxu0
    %1294 = vdwg.mxu0
    %1295 = vmatpush.bf16.msra.mxu0 %v1223
    %1296 = vmatpush.bf16.msra.mxu0 %v1221
    %1297 = vmatpush.bf16.msra.mxu0 %v1219
    %1298 = vmatpush.bf16.msra.mxu0 %v1217
    %1299 = vmatpush.bf16.msra.mxu0 %v1215
    %1300 = vmatpush.bf16.msra.mxu0 %v1213
    %1301 = vmatpush.bf16.msra.mxu0 %v1211
    %1302 = vmatpush.bf16.msra.mxu0 %v1209
    %1303 = vmatmul.bf16.gmra.mxu0 %v1031
    %v1304 = vpop.f32.mrf.mxu0
    %v1305 = vadd.f32 %v1292, %v1304
    %v1306 = vpop.f32.mrf.mxu0
    %1307 = vdwg.mxu0
    %v1340 = vunpack.c.l.b16 %v1032
    %v1341 = vunpack.c.h.b16 %v1032
    %v1342 = vunpack.c.l.b16 %v1033
    %v1343 = vunpack.c.h.b16 %v1033
    %v1344 = vunpack.c.l.b16 %v1034
    %v1345 = vunpack.c.h.b16 %v1034
    %v1346 = vunpack.c.l.b16 %v1035
    %v1347 = vunpack.c.h.b16 %v1035
    %v1348 = vunpack.c.l.b16 %v1036
    %v1349 = vunpack.c.h.b16 %v1036
    %v1350 = vunpack.c.l.b16 %v1037
    %v1351 = vunpack.c.h.b16 %v1037
    %v1352 = vunpack.c.l.b16 %v1038
    %v1353 = vunpack.c.h.b16 %v1038
    %v1354 = vunpack.c.l.b16 %v1039
    %v1355 = vunpack.c.h.b16 %v1039
    %v1356 = vunpack.c.l.b16 %v1040
    %v1357 = vunpack.c.h.b16 %v1040
    %v1358 = vunpack.c.l.b16 %v1041
    %v1359 = vunpack.c.h.b16 %v1041
    %v1360 = vunpack.c.l.b16 %v1042
    %v1361 = vunpack.c.h.b16 %v1042
    %v1362 = vunpack.c.l.b16 %v1043
    %v1363 = vunpack.c.h.b16 %v1043
    %v1364 = vunpack.c.l.b16 %v1044
    %v1365 = vunpack.c.h.b16 %v1044
    %v1366 = vunpack.c.l.b16 %v1045
    %v1367 = vunpack.c.h.b16 %v1045
    %v1368 = vunpack.c.l.b16 %v1046
    %v1369 = vunpack.c.h.b16 %v1046
    %v1370 = vunpack.c.l.b16 %v1047
    %v1371 = vunpack.c.h.b16 %v1047
    %v1372 = vunpack.c.l.b16 %v1048
    %v1373 = vunpack.c.h.b16 %v1048
    %v1374 = vunpack.c.l.b16 %v1049
    %v1375 = vunpack.c.h.b16 %v1049
    %v1376 = vunpack.c.l.b16 %v1050
    %v1377 = vunpack.c.h.b16 %v1050
    %v1378 = vunpack.c.l.b16 %v1051
    %v1379 = vunpack.c.h.b16 %v1051
    %v1380 = vunpack.c.l.b16 %v1052
    %v1381 = vunpack.c.h.b16 %v1052
    %v1382 = vunpack.c.l.b16 %v1053
    %v1383 = vunpack.c.h.b16 %v1053
    %v1384 = vunpack.c.l.b16 %v1054
    %v1385 = vunpack.c.h.b16 %v1054
    %v1386 = vunpack.c.l.b16 %v1055
    %v1387 = vunpack.c.h.b16 %v1055
    %v1388 = vunpack.c.l.b16 %v1056
    %v1389 = vunpack.c.h.b16 %v1056
    %v1390 = vunpack.c.l.b16 %v1057
    %v1391 = vunpack.c.h.b16 %v1057
    %v1392 = vunpack.c.l.b16 %v1058
    %v1393 = vunpack.c.h.b16 %v1058
    %v1394 = vunpack.c.l.b16 %v1059
    %v1395 = vunpack.c.h.b16 %v1059
    %v1396 = vunpack.c.l.b16 %v1060
    %v1397 = vunpack.c.h.b16 %v1060
    %v1398 = vunpack.c.l.b16 %v1061
    %v1399 = vunpack.c.h.b16 %v1061
    %v1400 = vunpack.c.l.b16 %v1062
    %v1401 = vunpack.c.h.b16 %v1062
    %v1402 = vunpack.c.l.b16 %v1063
    %v1403 = vunpack.c.h.b16 %v1063
    %v1404 = vpack.c.b16 %v1342, %v1340
    %v1405 = vpack.c.b16 %v1343, %v1341
    %v1406 = vpack.c.b16 %v1346, %v1344
    %v1407 = vpack.c.b16 %v1347, %v1345
    %v1408 = vpack.c.b16 %v1350, %v1348
    %v1409 = vpack.c.b16 %v1351, %v1349
    %v1410 = vpack.c.b16 %v1354, %v1352
    %v1411 = vpack.c.b16 %v1355, %v1353
    %v1412 = vpack.c.b16 %v1358, %v1356
    %v1413 = vpack.c.b16 %v1359, %v1357
    %v1414 = vpack.c.b16 %v1362, %v1360
    %v1415 = vpack.c.b16 %v1363, %v1361
    %v1416 = vpack.c.b16 %v1366, %v1364
    %v1417 = vpack.c.b16 %v1367, %v1365
    %v1418 = vpack.c.b16 %v1370, %v1368
    %v1419 = vpack.c.b16 %v1371, %v1369
    %v1420 = vpack.c.b16 %v1374, %v1372
    %v1421 = vpack.c.b16 %v1375, %v1373
    %v1422 = vpack.c.b16 %v1378, %v1376
    %v1423 = vpack.c.b16 %v1379, %v1377
    %v1424 = vpack.c.b16 %v1382, %v1380
    %v1425 = vpack.c.b16 %v1383, %v1381
    %v1426 = vpack.c.b16 %v1386, %v1384
    %v1427 = vpack.c.b16 %v1387, %v1385
    %v1428 = vpack.c.b16 %v1390, %v1388
    %v1429 = vpack.c.b16 %v1391, %v1389
    %v1430 = vpack.c.b16 %v1394, %v1392
    %v1431 = vpack.c.b16 %v1395, %v1393
    %v1432 = vpack.c.b16 %v1398, %v1396
    %v1433 = vpack.c.b16 %v1399, %v1397
    %v1434 = vpack.c.b16 %v1402, %v1400
    %v1435 = vpack.c.b16 %v1403, %v1401
    %1468 = vmatpush.bf16.msra.mxu0 %v1418
    %1469 = vmatpush.bf16.msra.mxu0 %v1416
    %1470 = vmatpush.bf16.msra.mxu0 %v1414
    %1471 = vmatpush.bf16.msra.mxu0 %v1412
    %1472 = vmatpush.bf16.msra.mxu0 %v1410
    %1473 = vmatpush.bf16.msra.mxu0 %v1408
    %1474 = vmatpush.bf16.msra.mxu0 %v1406
    %1475 = vmatpush.bf16.msra.mxu0 %v1404
    %1476 = vmatmul.bf16.gmra.mxu0 %v898
    %v1477 = vpop.f32.mrf.mxu0
    %v1478 = vadd.f32 %v1279, %v1477
    %v1479 = vpop.f32.mrf.mxu0
    %1480 = vdwg.mxu0
    %1481 = vmatpush.bf16.msra.mxu0 %v1434
    %1482 = vmatpush.bf16.msra.mxu0 %v1432
    %1483 = vmatpush.bf16.msra.mxu0 %v1430
    %1484 = vmatpush.bf16.msra.mxu0 %v1428
    %1485 = vmatpush.bf16.msra.mxu0 %v1426
    %1486 = vmatpush.bf16.msra.mxu0 %v1424
    %1487 = vmatpush.bf16.msra.mxu0 %v1422
    %1488 = vmatpush.bf16.msra.mxu0 %v1420
    %1489 = vmatmul.bf16.gmra.mxu0 %v899
    %v1490 = vpop.f32.mrf.mxu0
    %v1491 = vadd.f32 %v1478, %v1490
    %v1492 = vpop.f32.mrf.mxu0
    %1493 = vdwg.mxu0
    %1494 = vmatpush.bf16.msra.mxu0 %v1419
    %1495 = vmatpush.bf16.msra.mxu0 %v1417
    %1496 = vmatpush.bf16.msra.mxu0 %v1415
    %1497 = vmatpush.bf16.msra.mxu0 %v1413
    %1498 = vmatpush.bf16.msra.mxu0 %v1411
    %1499 = vmatpush.bf16.msra.mxu0 %v1409
    %1500 = vmatpush.bf16.msra.mxu0 %v1407
    %1501 = vmatpush.bf16.msra.mxu0 %v1405
    %1502 = vmatmul.bf16.gmra.mxu0 %v898
    %v1503 = vpop.f32.mrf.mxu0
    %v1504 = vadd.f32 %v1305, %v1503
    %v1505 = vpop.f32.mrf.mxu0
    %1506 = vdwg.mxu0
    %1507 = vmatpush.bf16.msra.mxu0 %v1435
    %1508 = vmatpush.bf16.msra.mxu0 %v1433
    %1509 = vmatpush.bf16.msra.mxu0 %v1431
    %1510 = vmatpush.bf16.msra.mxu0 %v1429
    %1511 = vmatpush.bf16.msra.mxu0 %v1427
    %1512 = vmatpush.bf16.msra.mxu0 %v1425
    %1513 = vmatpush.bf16.msra.mxu0 %v1423
    %1514 = vmatpush.bf16.msra.mxu0 %v1421
    %1515 = vmatmul.bf16.gmra.mxu0 %v899
    %v1516 = vpop.f32.mrf.mxu0
    %v1517 = vadd.f32 %v1504, %v1516
    %v1518 = vpop.f32.mrf.mxu0
    %1519 = vdwg.mxu0
    %v1520 = vld [vmem:[%s8] sm:$0x3]
    %v1522 = vperm.slane %v1520, 0
    %v1523 = vperm.slane %v1520, 1
    %v1526 = vadd.f32 %v1491, %v1522
    %v1527 = vadd.f32 %v1517, %v1523
    %v1528 = vmax.f32 %v1526, 0.0
    %v1529 = vmax.f32 %v1527, 0.0
    %v1530 = vpack.c.bf16 %v1528, %v1528
    %v1531 = vpack.c.bf16 %v1529, %v1529
    %v1532 = vld [vmem:[#allocation13] sm:$0xf]
    %v1533 = vld [vmem:[#allocation13 + $0x4] sm:$0xf]
    %v1534 = vld [vmem:[#allocation13 + $0x8] sm:$0xf]
    %v1535 = vld [vmem:[#allocation13 + $0xc] sm:$0xf]
    %v1536 = vld [vmem:[#allocation13 + $0x10] sm:$0xf]
    %v1537 = vld [vmem:[#allocation13 + $0x14] sm:$0xf]
    %v1538 = vld [vmem:[#allocation13 + $0x18] sm:$0xf]
    %v1539 = vld [vmem:[#allocation13 + $0x1c] sm:$0xf]
    %v1540 = vld [vmem:[#allocation13 + $0x20] sm:$0xf]
    %v1541 = vld [vmem:[#allocation13 + $0x24] sm:$0xf]
    %v1542 = vld [vmem:[#allocation13 + $0x28] sm:$0xf]
    %v1543 = vld [vmem:[#allocation13 + $0x2c] sm:$0xf]
    %v1544 = vld [vmem:[#allocation13 + $0x30] sm:$0xf]
    %v1545 = vld [vmem:[#allocation13 + $0x34] sm:$0xf]
    %v1546 = vld [vmem:[#allocation13 + $0x38] sm:$0xf]
    %v1547 = vld [vmem:[#allocation13 + $0x3c] sm:$0xf]
    %v1548 = vld [vmem:[#allocation13 + $0x40] sm:$0xf]
    %v1549 = vld [vmem:[#allocation13 + $0x44] sm:$0xf]
    %v1550 = vld [vmem:[#allocation13 + $0x48] sm:$0xf]
    %v1551 = vld [vmem:[#allocation13 + $0x4c] sm:$0xf]
    %v1552 = vld [vmem:[#allocation13 + $0x50] sm:$0xf]
    %v1553 = vld [vmem:[#allocation13 + $0x54] sm:$0xf]
    %v1554 = vld [vmem:[#allocation13 + $0x58] sm:$0xf]
    %v1555 = vld [vmem:[#allocation13 + $0x5c] sm:$0xf]
    %v1556 = vld [vmem:[#allocation13 + $0x60] sm:$0xf]
    %v1557 = vld [vmem:[#allocation13 + $0x64] sm:$0xf]
    %v1558 = vld [vmem:[#allocation13 + $0x68] sm:$0xf]
    %v1559 = vld [vmem:[#allocation13 + $0x6c] sm:$0xf]
    %v1560 = vld [vmem:[#allocation13 + $0x70] sm:$0xf]
    %v1561 = vld [vmem:[#allocation13 + $0x74] sm:$0xf]
    %v1562 = vld [vmem:[#allocation13 + $0x78] sm:$0xf]
    %v1563 = vld [vmem:[#allocation13 + $0x7c] sm:$0xf]
    %v1564 = vld [vmem:[%s10] sm:$0x1]
    %v1566 = vperm.slane %v1564, 0
    %v1600 = vunpack.c.l.b16 %v1532
    %v1601 = vunpack.c.l.b16 %v1533
    %v1602 = vunpack.c.l.b16 %v1534
    %v1603 = vunpack.c.l.b16 %v1535
    %v1604 = vunpack.c.l.b16 %v1536
    %v1605 = vunpack.c.l.b16 %v1537
    %v1606 = vunpack.c.l.b16 %v1538
    %v1607 = vunpack.c.l.b16 %v1539
    %v1608 = vunpack.c.l.b16 %v1540
    %v1609 = vunpack.c.l.b16 %v1541
    %v1610 = vunpack.c.l.b16 %v1542
    %v1611 = vunpack.c.l.b16 %v1543
    %v1612 = vunpack.c.l.b16 %v1544
    %v1613 = vunpack.c.l.b16 %v1545
    %v1614 = vunpack.c.l.b16 %v1546
    %v1615 = vunpack.c.l.b16 %v1547
    %v1616 = vunpack.c.l.b16 %v1548
    %v1617 = vunpack.c.l.b16 %v1549
    %v1618 = vunpack.c.l.b16 %v1550
    %v1619 = vunpack.c.l.b16 %v1551
    %v1620 = vunpack.c.l.b16 %v1552
    %v1621 = vunpack.c.l.b16 %v1553
    %v1622 = vunpack.c.l.b16 %v1554
    %v1623 = vunpack.c.l.b16 %v1555
    %v1624 = vunpack.c.l.b16 %v1556
    %v1625 = vunpack.c.l.b16 %v1557
    %v1626 = vunpack.c.l.b16 %v1558
    %v1627 = vunpack.c.l.b16 %v1559
    %v1628 = vunpack.c.l.b16 %v1560
    %v1629 = vunpack.c.l.b16 %v1561
    %v1630 = vunpack.c.l.b16 %v1562
    %v1631 = vunpack.c.l.b16 %v1563
    %v1632 = vpack.c.b16 %v1601, %v1600
    %v1633 = vpack.c.b16 %v1603, %v1602
    %v1634 = vpack.c.b16 %v1605, %v1604
    %v1635 = vpack.c.b16 %v1607, %v1606
    %v1636 = vpack.c.b16 %v1609, %v1608
    %v1637 = vpack.c.b16 %v1611, %v1610
    %v1638 = vpack.c.b16 %v1613, %v1612
    %v1639 = vpack.c.b16 %v1615, %v1614
    %v1640 = vpack.c.b16 %v1617, %v1616
    %v1641 = vpack.c.b16 %v1619, %v1618
    %v1642 = vpack.c.b16 %v1621, %v1620
    %v1643 = vpack.c.b16 %v1623, %v1622
    %v1644 = vpack.c.b16 %v1625, %v1624
    %v1645 = vpack.c.b16 %v1627, %v1626
    %v1646 = vpack.c.b16 %v1629, %v1628
    %v1647 = vpack.c.b16 %v1631, %v1630
    %1664 = vmatpush.bf16.msra.mxu0 %v1639
    %1665 = vmatpush.bf16.msra.mxu0 %v1638
    %1666 = vmatpush.bf16.msra.mxu0 %v1637
    %1667 = vmatpush.bf16.msra.mxu0 %v1636
    %1668 = vmatpush.bf16.msra.mxu0 %v1635
    %1669 = vmatpush.bf16.msra.mxu0 %v1634
    %1670 = vmatpush.bf16.msra.mxu0 %v1633
    %1671 = vmatpush.bf16.msra.mxu0 %v1632
    %1672 = vmatmul.bf16.gmra.mxu0 %v1530
    %v1673 = vpop.f32.mrf.mxu0
    %v1674 = vadd.f32 %v1566, %v1673
    %v1675 = vpop.f32.mrf.mxu0
    %1676 = vdwg.mxu0
    %1677 = vmatpush.bf16.msra.mxu0 %v1647
    %1678 = vmatpush.bf16.msra.mxu0 %v1646
    %1679 = vmatpush.bf16.msra.mxu0 %v1645
    %1680 = vmatpush.bf16.msra.mxu0 %v1644
    %1681 = vmatpush.bf16.msra.mxu0 %v1643
    %1682 = vmatpush.bf16.msra.mxu0 %v1642
    %1683 = vmatpush.bf16.msra.mxu0 %v1641
    %1684 = vmatpush.bf16.msra.mxu0 %v1640
    %1685 = vmatmul.bf16.gmra.mxu0 %v1531
    %v1686 = vpop.f32.mrf.mxu0
    %v1687 = vadd.f32 %v1674, %v1686
    %v1688 = vpop.f32.mrf.mxu0
    %1689 = vdwg.mxu0
    %v1690 = vpack.c.bf16 %v1687, %v1687
    %1691 = vst [vmem:[#allocation14] sm:$0xf] %v1690
    // Predicated region
    $region74: #{tpu_custom_call.1} parent=1 // pred_check
      _
    $region75: #{tpu_custom_call.1} parent=1 // pred_check_branch
      %1693 = sbr.rel (0) target = $region77
    $region76: #{tpu_custom_call.1} parent=1 // pred_region
      %1695 = vsyncadd [#allocation4], 0
      %s1697 = sshll.u32 [#allocation14], 4
      %s1698 = int_to_ptr.vmem [resolvable:$true] %s1697
      %s1699 = sshll.u32 %s11, 4
      %s1700 = int_to_ptr.hbm [resolvable:$true] %s1699
      %1702 = dma.vmem_to_hbm [thread:$0]  %s1698, 64, %s1700, [#allocation4]
    $region77: #{tpu_custom_call.1} parent=1 // pred_fallthru
      _
    // Predicated region
    $region78: #{tpu_custom_call.1} parent=1 // pred_check
      _
    $region79: #{tpu_custom_call.1} parent=1 // pred_check_branch
      %1704 = sbr.rel (0) target = $region81
    $region80: #{tpu_custom_call.1} parent=1 // pred_region
      %1706 = dma.done [#allocation4], 64
    $region81: #{tpu_custom_call.1} parent=1 // pred_fallthru
      _
    %1707 = vsyncpa [#allocation3], 1
    %1708 = vsyncpa [#allocation6], 1
    %1709 = vsyncpa [#allocation9], 1
    %1710 = vsyncpa [#allocation12], 1
    %1711 = vsyncpa [#allocation4], 1

</llo_original>
